<compile_context>
chip_gen: v7x
topology: tpu7x:2x2x1
jax: 0.10.0
libtpu: 0.0.40
codegen_flags: <defaults>
</compile_context>

<pallas_src>
import functools

import jax
import jax.numpy as jnp
from jax import lax
from jax.experimental import pallas as pl
from jax.experimental.pallas import tpu as pltpu

EPS = 1e-5


def _round_up(v, m):
    return ((v + m - 1) // m) * m


def _dtd_kernel(x_ref, mask_ref, w1_ref, g1_ref, b1_ref,
                w2_ref, g2_ref, b2_ref, w3_ref, b3_ref, out_ref,
                *, row_stride, n1, n2):
    """All activations are (channels, npix) with npix = N*Hg*Wp (pixels on the lane axis)."""
    npix = out_ref.shape[1]

    def shift(v, s):
        # Shift along the flattened (n, h, w) pixel axis: shift(v, s)[:, i] = v[:, i - s].
        # A spatial shift of (kh, kw) is a flat shift of kh*row_stride + kw; batch/row
        # boundaries only ever pull in zero padding pixels (checked in the wrapper layout).
        s = s % npix
        return v if s == 0 else pltpu.roll(v, shift=s, axis=1)

    # ---------- Stage 1: Conv2d 1x1 (8->16, no bias) + BatchNorm2d (batch stats) + ReLU
    x = x_ref[...]                                                           # (8, npix)
    h1 = jnp.dot(w1_ref[...], x, preferred_element_type=jnp.float32)        # (16, npix)
    inv1 = 1.0 / n1                     # padding pixels are exactly 0 -> sums are exact
    m1 = jnp.sum(h1, axis=1, keepdims=True) * inv1
    v1 = jnp.sum(h1 * h1, axis=1, keepdims=True) * inv1 - m1 * m1
    sc1 = g1_ref[...] * lax.rsqrt(v1 + EPS)
    # Re-mask so padding pixels stay exactly zero (BN shift would otherwise leak into them).
    h1n = jnp.maximum(h1 * sc1 + (b1_ref[...] - m1 * sc1), 0.0) * mask_ref[...]

    # ---------- Stage 2: ConvTranspose2d 2x2 stride-1 (16->8, no bias) + BatchNorm2d + ReLU
    # kw taps: concat [h1n, h1n shifted by 1 pixel] on the sublane axis; one (16,32) weight
    # produces both kh tap groups; the kh=1 group is shifted by one grid row and added.
    hcat = jnp.concatenate([h1n, shift(h1n, 1)], axis=0)                     # (32, npix)
    t2 = jnp.dot(w2_ref[...], hcat, preferred_element_type=jnp.float32)      # (16, npix)
    y2 = t2[0:8, :] + shift(t2[8:16, :], row_stride)                         # (8, npix)
    inv2 = 1.0 / n2
    m2 = jnp.sum(y2, axis=1, keepdims=True) * inv2
    v2 = jnp.sum(y2 * y2, axis=1, keepdims=True) * inv2 - m2 * m2
    sc2 = g2_ref[...] * lax.rsqrt(v2 + EPS)
    y2n = jnp.maximum(y2 * sc2 + (b2_ref[...] - m2 * sc2), 0.0)
    # (y2n padding pixels become a BN constant, but no valid Stage-3 output ever reads them.)

    # ---------- Stage 3: Conv2d 4x4 valid (8->4, bias) + LogSigmoid
    # kw taps folded into one K=32 matmul against the kw-shifted concat of y2n; the four
    # kh tap groups come out stacked on sublanes (padded to 8 rows each -> aligned slices)
    # and are combined with 3 row-shifts + adds.
    ycat = jnp.concatenate(
        [y2n, shift(y2n, -1), shift(y2n, -2), shift(y2n, -3)], axis=0)       # (32, npix)
    t3 = jnp.dot(w3_ref[...], ycat, preferred_element_type=jnp.float32)      # (32, npix)
    acc = t3[0:8, :]
    for kh in range(1, 4):
        acc = acc + shift(t3[8 * kh:8 * (kh + 1), :], -kh * row_stride)
    acc = acc + b3_ref[...]
    # Numerically stable log-sigmoid; single dense (8, npix) store (wrapper keeps rows 0..3).
    out_ref[...] = jnp.minimum(acc, 0.0) - jnp.log(1.0 + jnp.exp(-jnp.abs(acc)))


def decoder_track_d(x_nchw, params):
    """x_nchw: (N, 8, H, W) float32 -> (N, 4, H-2, W-2) float32 (PyTorch NCHW convention)."""
    N, C0, H, W = x_nchw.shape
    assert C0 == 8
    C1, C2, C3 = 16, 8, 4
    H1, W1 = H + 1, W + 1          # deconv output spatial size
    Ho, Wo = H1 - 3, W1 - 3        # final 4x4-valid-conv output spatial size

    # Pixel grid: per batch Hg rows x Wp cols, zero padded, flattened onto the lane axis.
    # Wp >= W1 so every spatial shift lands either on valid data or on zero padding, and the
    # total pixel count is bumped to a multiple of 128 for fully dense lane tiles.
    Wp = _round_up(W1, 8)
    Hg = H + 2
    while (N * Hg * Wp) % 128 != 0:
        Wp += 8
    npix = N * Hg * Wp

    x = jnp.transpose(x_nchw.astype(jnp.float32), (1, 0, 2, 3))              # (C0, N, H, W)
    x_grid = jnp.pad(x, ((0, 0), (0, 0), (0, Hg - H), (0, Wp - W))).reshape(C0, npix)
    mask = jnp.pad(jnp.ones((1, N, H, W), jnp.float32),
                   ((0, 0), (0, 0), (0, Hg - H), (0, Wp - W))).reshape(1, npix)

    # ---- weight repacking (host side, all tiny) ----
    # 1x1 conv: (Cout, Cin, 1, 1) -> (16, 8)
    w1 = params["conv1_w"][:, :, 0, 0]
    # deconv (Cin, Cout, kh, kw) -> rows (kh, cout), cols (kw, cin): (16, 32)
    w2t = jnp.transpose(params["deconv_w"], (2, 3, 1, 0))                    # (2, 2, 8, 16)
    w2 = jnp.transpose(w2t, (0, 2, 1, 3)).reshape(2 * C2, 2 * C1)
    # conv3 (Cout, Cin, kh, kw) -> rows (kh, cout padded 4->8), cols (kw, cin): (32, 32)
    w3t = jnp.transpose(params["conv3_w"], (2, 3, 0, 1))                     # (4, 4, 4, 8)
    w3t = jnp.pad(w3t, ((0, 0), (0, 0), (0, 8 - C3), (0, 0)))
    w3 = jnp.transpose(w3t, (0, 2, 1, 3)).reshape(4 * 8, 4 * C2)

    g1 = params["bn1_gamma"].reshape(C1, 1)
    b1 = params["bn1_beta"].reshape(C1, 1)
    g2 = params["bn2_gamma"].reshape(C2, 1)
    b2 = params["bn2_beta"].reshape(C2, 1)
    b3 = jnp.pad(params["conv3_b"].reshape(C3, 1), ((0, 8 - C3), (0, 0)))

    kernel = functools.partial(
        _dtd_kernel, row_stride=Wp,
        n1=float(N * H * W),          # BN1 batch-stat count (valid pixels only)
        n2=float(N * H1 * W1))        # BN2 batch-stat count

    args = (x_grid, mask, w1, g1, b1, w2, g2, b2, w3, b3)
    vmem = lambda: pl.BlockSpec(memory_space=pltpu.MemorySpace.VMEM)

    # Single-step call: whole arrays as VMEM blocks, no grid / scratch / pipelining needed
    # (~90 KB total traffic).  On v7x, batching independent instances would add a leading
    # "parallel" grid axis; BN batch statistics forbid splitting a single forward call.
    out_grid = pl.pallas_call(
        kernel,
        out_shape=jax.ShapeDtypeStruct((8, npix), jnp.float32),
        in_specs=[vmem() for _ in args],
        out_specs=vmem(),
    )(*args)

    # Dense padded slab -> valid channels / pixels -> NCHW (all wrapper-side, fuses in XLA).
    out = out_grid.reshape(8, N, Hg, Wp)[:C3, :, :Ho, :Wo]
    return jnp.transpose(out, (1, 0, 2, 3))


# ----------------------------- pure-JAX reference (for checking) -----------------------------
def _bn_relu_ref(y, gamma, beta):
    axes = tuple(range(y.ndim - 1))
    m = jnp.mean(y, axis=axes, keepdims=True)
    v = jnp.mean((y - m) ** 2, axis=axes, keepdims=True)
    return jnp.maximum((y - m) * lax.rsqrt(v + EPS) * gamma + beta, 0.0)


def decoder_track_d_reference(x_nchw, params):
    x = jnp.transpose(x_nchw, (0, 2, 3, 1)).astype(jnp.float32)
    N, H, W, _ = x.shape
    w1 = jnp.transpose(params["conv1_w"][:, :, 0, 0])
    h1 = _bn_relu_ref(jnp.einsum("nhwc,cd->nhwd", x, w1),
                      params["bn1_gamma"], params["bn1_beta"])
    w2 = jnp.transpose(params["deconv_w"], (2, 3, 0, 1))                     # (2,2,Cin,Cout)
    y2 = jnp.zeros((N, H + 1, W + 1, w2.shape[-1]), jnp.float32)
    for kh in range(2):
        for kw in range(2):
            y2 = y2.at[:, kh:kh + H, kw:kw + W, :].add(
                jnp.einsum("nhwc,cd->nhwd", h1, w2[kh, kw]))
    y2 = _bn_relu_ref(y2, params["bn2_gamma"], params["bn2_beta"])
    w3 = jnp.transpose(params["conv3_w"], (2, 3, 1, 0))                      # (4,4,Cin,Cout)
    Ho, Wo = H - 2, W - 2
    acc = jnp.broadcast_to(params["conv3_b"].reshape(1, 1, 1, -1),
                           (N, Ho, Wo, w3.shape[-1])).astype(jnp.float32)
    for kh in range(4):
        for kw in range(4):
            acc = acc + jnp.einsum("nhwc,cd->nhwd",
                                   y2[:, kh:kh + Ho, kw:kw + Wo, :], w3[kh, kw])
    out = jnp.minimum(acc, 0.0) - jnp.log1p(jnp.exp(-jnp.abs(acc)))
    return jnp.transpose(out, (0, 3, 1, 2))


def init_params(key):
    ks = jax.random.split(key, 8)
    return {
        # PyTorch parameter layouts for DecoderTrackD
        "conv1_w": 0.1 * jax.random.normal(ks[0], (16, 8, 1, 1), jnp.float32),   # Conv2d(8,16,1,bias=False)
        "bn1_gamma": 1.0 + 0.1 * jax.random.normal(ks[1], (16,), jnp.float32),
        "bn1_beta": 0.1 * jax.random.normal(ks[2], (16,), jnp.float32),
        "deconv_w": 0.1 * jax.random.normal(ks[3], (16, 8, 2, 2), jnp.float32),  # ConvTranspose2d(16,8,2,bias=False)
        "bn2_gamma": 1.0 + 0.1 * jax.random.normal(ks[4], (8,), jnp.float32),
        "bn2_beta": 0.1 * jax.random.normal(ks[5], (8,), jnp.float32),
        "conv3_w": 0.1 * jax.random.normal(ks[6], (4, 8, 4, 4), jnp.float32),    # Conv2d(8,4,4)
        "conv3_b": 0.1 * jax.random.normal(ks[7], (4,), jnp.float32),
    }


if __name__ == "__main__":
    key = jax.random.PRNGKey(0)
    k_x, k_p = jax.random.split(key)
    params = init_params(k_p)

    # Small input consistent with the module: NCHW, 8 input channels, 16x16 spatial.
    x = jax.random.normal(k_x, (2, 8, 16, 16), jnp.float32)

    out = jax.block_until_ready(decoder_track_d(x, params))
    assert out.shape == (2, 4, 14, 14), out.shape
    assert bool(jnp.all(jnp.isfinite(out)))
    assert bool(jnp.all(out <= 0.0))   # LogSigmoid output is always <= 0

    ref = jax.block_until_ready(decoder_track_d_reference(x, params))
    assert bool(jnp.allclose(out, ref, atol=1e-2, rtol=1e-2)), \
        float(jnp.max(jnp.abs(out - ref)))

    print("KERNEL_OK")
</pallas_src>

<mosaic_0001>
module attributes {stable_mosaic.version = 11 : i64} {
  func.func @_dtd_kernel(%arg0: memref<8x1152xf32, #tpu.memory_space<vmem>>, %arg1: memref<1x1152xf32, #tpu.memory_space<vmem>>, %arg2: memref<16x8xf32, #tpu.memory_space<vmem>>, %arg3: memref<16x1xf32, #tpu.memory_space<vmem>>, %arg4: memref<16x1xf32, #tpu.memory_space<vmem>>, %arg5: memref<16x32xf32, #tpu.memory_space<vmem>>, %arg6: memref<8x1xf32, #tpu.memory_space<vmem>>, %arg7: memref<8x1xf32, #tpu.memory_space<vmem>>, %arg8: memref<32x32xf32, #tpu.memory_space<vmem>>, %arg9: memref<8x1xf32, #tpu.memory_space<vmem>>, %arg10: memref<8x1152xf32, #tpu.memory_space<vmem>>) attributes {dimension_semantics = [], scalar_prefetch = 0 : i64, scratch_operands = 0 : i64, tpu.core_type = #tpu.core_type<tc>} {
    %c0 = arith.constant 0 : index
    %c0_0 = arith.constant 0 : index
    %0 = vector.load %arg0[%c0, %c0_0] : memref<8x1152xf32, #tpu.memory_space<vmem>>, vector<8x1152xf32>
    %c0_1 = arith.constant 0 : index
    %c0_2 = arith.constant 0 : index
    %1 = vector.load %arg2[%c0_1, %c0_2] : memref<16x8xf32, #tpu.memory_space<vmem>>, vector<16x8xf32>
    %cst = arith.constant dense<0.000000e+00> : vector<16x1152xf32>
    %2 = tpu.matmul %1, %0, %cst {dimension_numbers = #tpu.dot_dimension_numbers<[1], [0], [0], [1], [0, 0, 1, 1], [], []>} : vector<16x8xf32>, vector<8x1152xf32>, vector<16x1152xf32> -> vector<16x1152xf32>
    %cst_3 = arith.constant dense<0.000000e+00> : vector<16xf32>
    %3 = vector.multi_reduction <add>, %2, %cst_3 [1] : vector<16x1152xf32> to vector<16xf32>
    %4 = vector.shape_cast %3 : vector<16xf32> to vector<16x1xf32>
    %cst_4 = arith.constant 0.001953125 : f32
    %5 = vector.broadcast %cst_4 : f32 to vector<16x1xf32>
    %6 = arith.mulf %4, %5 : vector<16x1xf32>
    %7 = arith.mulf %2, %2 : vector<16x1152xf32>
    %cst_5 = arith.constant dense<0.000000e+00> : vector<16xf32>
    %8 = vector.multi_reduction <add>, %7, %cst_5 [1] : vector<16x1152xf32> to vector<16xf32>
    %9 = vector.shape_cast %8 : vector<16xf32> to vector<16x1xf32>
    %cst_6 = arith.constant 0.001953125 : f32
    %10 = vector.broadcast %cst_6 : f32 to vector<16x1xf32>
    %11 = arith.mulf %9, %10 : vector<16x1xf32>
    %12 = arith.mulf %6, %6 : vector<16x1xf32>
    %13 = arith.subf %11, %12 : vector<16x1xf32>
    %c0_7 = arith.constant 0 : index
    %c0_8 = arith.constant 0 : index
    %14 = vector.load %arg3[%c0_7, %c0_8] : memref<16x1xf32, #tpu.memory_space<vmem>>, vector<16x1xf32>
    %cst_9 = arith.constant 9.99999974E-6 : f32
    %15 = vector.broadcast %cst_9 : f32 to vector<16x1xf32>
    %16 = arith.addf %13, %15 : vector<16x1xf32>
    %17 = math.rsqrt %16 : vector<16x1xf32>
    %18 = arith.mulf %14, %17 : vector<16x1xf32>
    %19 = vector.broadcast %18 : vector<16x1xf32> to vector<16x1152xf32>
    %20 = arith.mulf %2, %19 : vector<16x1152xf32>
    %c0_10 = arith.constant 0 : index
    %c0_11 = arith.constant 0 : index
    %21 = vector.load %arg4[%c0_10, %c0_11] : memref<16x1xf32, #tpu.memory_space<vmem>>, vector<16x1xf32>
    %22 = arith.mulf %6, %18 : vector<16x1xf32>
    %23 = arith.subf %21, %22 : vector<16x1xf32>
    %24 = vector.broadcast %23 : vector<16x1xf32> to vector<16x1152xf32>
    %25 = arith.addf %20, %24 : vector<16x1152xf32>
    %cst_12 = arith.constant 0.000000e+00 : f32
    %26 = vector.broadcast %cst_12 : f32 to vector<16x1152xf32>
    %27 = arith.maximumf %25, %26 : vector<16x1152xf32>
    %c0_13 = arith.constant 0 : index
    %c0_14 = arith.constant 0 : index
    %28 = vector.load %arg1[%c0_13, %c0_14] : memref<1x1152xf32, #tpu.memory_space<vmem>>, vector<1x1152xf32>
    %29 = vector.broadcast %28 : vector<1x1152xf32> to vector<16x1152xf32>
    %30 = arith.mulf %27, %29 : vector<16x1152xf32>
    %c1_i32 = arith.constant 1 : i32
    %31 = tpu.dynamic_rotate %30 by %c1_i32 dim 1 : vector<16x1152xf32>, i32 -> vector<16x1152xf32>
    %32 = tpu.concatenate %30, %31 in 0 : vector<16x1152xf32>, vector<16x1152xf32> -> vector<32x1152xf32>
    %c0_15 = arith.constant 0 : index
    %c0_16 = arith.constant 0 : index
    %33 = vector.load %arg5[%c0_15, %c0_16] : memref<16x32xf32, #tpu.memory_space<vmem>>, vector<16x32xf32>
    %cst_17 = arith.constant dense<0.000000e+00> : vector<16x1152xf32>
    %34 = tpu.matmul %33, %32, %cst_17 {dimension_numbers = #tpu.dot_dimension_numbers<[1], [0], [0], [1], [0, 0, 1, 1], [], []>} : vector<16x32xf32>, vector<32x1152xf32>, vector<16x1152xf32> -> vector<16x1152xf32>
    %35 = vector.extract_strided_slice %34 {offsets = [0, 0], sizes = [8, 1152], strides = [1, 1]} : vector<16x1152xf32> to vector<8x1152xf32>
    %36 = vector.extract_strided_slice %34 {offsets = [8, 0], sizes = [8, 1152], strides = [1, 1]} : vector<16x1152xf32> to vector<8x1152xf32>
    %c32_i32 = arith.constant 32 : i32
    %37 = tpu.dynamic_rotate %36 by %c32_i32 dim 1 : vector<8x1152xf32>, i32 -> vector<8x1152xf32>
    %38 = arith.addf %35, %37 : vector<8x1152xf32>
    %cst_18 = arith.constant dense<0.000000e+00> : vector<8xf32>
    %39 = vector.multi_reduction <add>, %38, %cst_18 [1] : vector<8x1152xf32> to vector<8xf32>
    %40 = vector.shape_cast %39 : vector<8xf32> to vector<8x1xf32>
    %cst_19 = arith.constant 0.00173010386 : f32
    %41 = vector.broadcast %cst_19 : f32 to vector<8x1xf32>
    %42 = arith.mulf %40, %41 : vector<8x1xf32>
    %43 = arith.mulf %38, %38 : vector<8x1152xf32>
    %cst_20 = arith.constant dense<0.000000e+00> : vector<8xf32>
    %44 = vector.multi_reduction <add>, %43, %cst_20 [1] : vector<8x1152xf32> to vector<8xf32>
    %45 = vector.shape_cast %44 : vector<8xf32> to vector<8x1xf32>
    %cst_21 = arith.constant 0.00173010386 : f32
    %46 = vector.broadcast %cst_21 : f32 to vector<8x1xf32>
    %47 = arith.mulf %45, %46 : vector<8x1xf32>
    %48 = arith.mulf %42, %42 : vector<8x1xf32>
    %49 = arith.subf %47, %48 : vector<8x1xf32>
    %c0_22 = arith.constant 0 : index
    %c0_23 = arith.constant 0 : index
    %50 = vector.load %arg6[%c0_22, %c0_23] : memref<8x1xf32, #tpu.memory_space<vmem>>, vector<8x1xf32>
    %cst_24 = arith.constant 9.99999974E-6 : f32
    %51 = vector.broadcast %cst_24 : f32 to vector<8x1xf32>
    %52 = arith.addf %49, %51 : vector<8x1xf32>
    %53 = math.rsqrt %52 : vector<8x1xf32>
    %54 = arith.mulf %50, %53 : vector<8x1xf32>
    %55 = vector.broadcast %54 : vector<8x1xf32> to vector<8x1152xf32>
    %56 = arith.mulf %38, %55 : vector<8x1152xf32>
    %c0_25 = arith.constant 0 : index
    %c0_26 = arith.constant 0 : index
    %57 = vector.load %arg7[%c0_25, %c0_26] : memref<8x1xf32, #tpu.memory_space<vmem>>, vector<8x1xf32>
    %58 = arith.mulf %42, %54 : vector<8x1xf32>
    %59 = arith.subf %57, %58 : vector<8x1xf32>
    %60 = vector.broadcast %59 : vector<8x1xf32> to vector<8x1152xf32>
    %61 = arith.addf %56, %60 : vector<8x1152xf32>
    %cst_27 = arith.constant 0.000000e+00 : f32
    %62 = vector.broadcast %cst_27 : f32 to vector<8x1152xf32>
    %63 = arith.maximumf %61, %62 : vector<8x1152xf32>
    %c1151_i32 = arith.constant 1151 : i32
    %64 = tpu.dynamic_rotate %63 by %c1151_i32 dim 1 : vector<8x1152xf32>, i32 -> vector<8x1152xf32>
    %c1150_i32 = arith.constant 1150 : i32
    %65 = tpu.dynamic_rotate %63 by %c1150_i32 dim 1 : vector<8x1152xf32>, i32 -> vector<8x1152xf32>
    %c1149_i32 = arith.constant 1149 : i32
    %66 = tpu.dynamic_rotate %63 by %c1149_i32 dim 1 : vector<8x1152xf32>, i32 -> vector<8x1152xf32>
    %67 = tpu.concatenate %63, %64, %65, %66 in 0 : vector<8x1152xf32>, vector<8x1152xf32>, vector<8x1152xf32>, vector<8x1152xf32> -> vector<32x1152xf32>
    %c0_28 = arith.constant 0 : index
    %c0_29 = arith.constant 0 : index
    %68 = vector.load %arg8[%c0_28, %c0_29] : memref<32x32xf32, #tpu.memory_space<vmem>>, vector<32x32xf32>
    %cst_30 = arith.constant dense<0.000000e+00> : vector<32x1152xf32>
    %69 = tpu.matmul %68, %67, %cst_30 {dimension_numbers = #tpu.dot_dimension_numbers<[1], [0], [0], [1], [0, 0, 1, 1], [], []>} : vector<32x32xf32>, vector<32x1152xf32>, vector<32x1152xf32> -> vector<32x1152xf32>
    %70 = vector.extract_strided_slice %69 {offsets = [0, 0], sizes = [8, 1152], strides = [1, 1]} : vector<32x1152xf32> to vector<8x1152xf32>
    %71 = vector.extract_strided_slice %69 {offsets = [8, 0], sizes = [8, 1152], strides = [1, 1]} : vector<32x1152xf32> to vector<8x1152xf32>
    %c1120_i32 = arith.constant 1120 : i32
    %72 = tpu.dynamic_rotate %71 by %c1120_i32 dim 1 : vector<8x1152xf32>, i32 -> vector<8x1152xf32>
    %73 = arith.addf %70, %72 : vector<8x1152xf32>
    %74 = vector.extract_strided_slice %69 {offsets = [16, 0], sizes = [8, 1152], strides = [1, 1]} : vector<32x1152xf32> to vector<8x1152xf32>
    %c1088_i32 = arith.constant 1088 : i32
    %75 = tpu.dynamic_rotate %74 by %c1088_i32 dim 1 : vector<8x1152xf32>, i32 -> vector<8x1152xf32>
    %76 = arith.addf %73, %75 : vector<8x1152xf32>
    %77 = vector.extract_strided_slice %69 {offsets = [24, 0], sizes = [8, 1152], strides = [1, 1]} : vector<32x1152xf32> to vector<8x1152xf32>
    %c1056_i32 = arith.constant 1056 : i32
    %78 = tpu.dynamic_rotate %77 by %c1056_i32 dim 1 : vector<8x1152xf32>, i32 -> vector<8x1152xf32>
    %79 = arith.addf %76, %78 : vector<8x1152xf32>
    %c0_31 = arith.constant 0 : index
    %c0_32 = arith.constant 0 : index
    %80 = vector.load %arg9[%c0_31, %c0_32] : memref<8x1xf32, #tpu.memory_space<vmem>>, vector<8x1xf32>
    %81 = vector.broadcast %80 : vector<8x1xf32> to vector<8x1152xf32>
    %82 = arith.addf %79, %81 : vector<8x1152xf32>
    %cst_33 = arith.constant 0.000000e+00 : f32
    %83 = vector.broadcast %cst_33 : f32 to vector<8x1152xf32>
    %84 = arith.minimumf %82, %83 : vector<8x1152xf32>
    %85 = math.absf %82 : vector<8x1152xf32>
    %cst_34 = arith.constant 0.000000e+00 : f32
    %86 = vector.broadcast %cst_34 : f32 to vector<8x1152xf32>
    %87 = arith.subf %86, %85 : vector<8x1152xf32>
    %88 = math.exp %87 : vector<8x1152xf32>
    %cst_35 = arith.constant 1.000000e+00 : f32
    %89 = vector.broadcast %cst_35 : f32 to vector<8x1152xf32>
    %90 = arith.addf %89, %88 : vector<8x1152xf32>
    %91 = math.log %90 : vector<8x1152xf32>
    %92 = arith.subf %84, %91 : vector<8x1152xf32>
    %c0_36 = arith.constant 0 : index
    %c0_37 = arith.constant 0 : index
    %93 = vector.load %arg10[%c0_36, %c0_37] : memref<8x1152xf32, #tpu.memory_space<vmem>>, vector<8x1152xf32>
    tpu.vector_store %arg10[%c0_36, %c0_37], %92 {strides = array<i32>} : memref<8x1152xf32, #tpu.memory_space<vmem>>, vector<8x1152xf32>,
    return
  }
}

</mosaic_0001>

<llo_original>
// kernel: tpu_custom_call.1
$region0: #{tpu_custom_call.1}
  #allocation0 [shape = 'u32[]', space=smem, size = 0x4, offset = 0x4, fixed_abs, tag = 'smem constant byte address 0x4 - core index']
  #allocation1 [shape = 'u32[144,128]{1,0:T(1,128)}', space=vmem, size = 0x12000, scoped, tag = 'internal scratch']
  %s0 = inlined_call_operand.vmem [shape: f32[8,1152], index: 0, kind: input, shape index: {}]
  %s1 = inlined_call_operand.hbm [shape: f32[1,1152], index: 1, kind: input, shape index: {}]
  %s2 = inlined_call_operand.vmem [shape: f32[16,8], index: 2, kind: input, shape index: {}]
  %s3 = inlined_call_operand.vmem [shape: f32[16,1], index: 3, kind: input, shape index: {}]
  %s4 = inlined_call_operand.vmem [shape: f32[16,1], index: 4, kind: input, shape index: {}]
  %s5 = inlined_call_operand.hbm [shape: f32[16,32], index: 5, kind: input, shape index: {}]
  %s6 = inlined_call_operand.vmem [shape: f32[8,1], index: 6, kind: input, shape index: {}]
  %s7 = inlined_call_operand.vmem [shape: f32[8,1], index: 7, kind: input, shape index: {}]
  %s8 = inlined_call_operand.vmem [shape: f32[32,32], index: 8, kind: input, shape index: {}]
  %s9 = inlined_call_operand.vmem [shape: f32[8,1], index: 9, kind: input, shape index: {}]
  %s10 = inlined_call_operand.hbm [shape: f32[8,1152], index: 10, kind: output, shape index: {}]
  %s11 = sld [smem:[#allocation0]]
  $region58: #{tpu_custom_call.1} parent=0
    _
  %s13 = ssub.s32 1, %s11
  %s14 = scalar_select 0, %s13, %s11
  $region1: #{tpu_custom_call.1} parent=0
    #allocation2 [shape = 'u8[4608]{0}', space=vmem, size = 0x1400, scoped, tag = 'input window, operand 1, single buffered']
    #allocation3 [shape = 's32[1]{0}', space=sflag, size = 0x4, scoped, tag = 'scoped memory for tpu_custom_call.1']
    #allocation4 [shape = 's32[1]{0}', space=sflag, size = 0x4, scoped, tag = 'scoped memory for tpu_custom_call.1']
    #allocation5 [shape = 'u8[8192]{0}', space=vmem, size = 0x2000, scoped, tag = 'input window, operand 5, single buffered']
    #allocation6 [shape = 's32[1]{0}', space=sflag, size = 0x4, scoped, tag = 'scoped memory for tpu_custom_call.1']
    #allocation7 [shape = 'u8[36864]{0}', space=vmem, size = 0x9000, scoped, tag = 'output window, operand 0, single buffered']
    %15 = vsyncpa [#allocation3], 0
    %16 = vsyncpa [#allocation6], 0
    %17 = vsyncpa [#allocation4], 0
    // Predicated region
    $region2: #{tpu_custom_call.1} parent=1 // pred_check
      _
    $region3: #{tpu_custom_call.1} parent=1 // pred_check_branch
      %19 = sbr.rel (0) target = $region5
    $region4: #{tpu_custom_call.1} parent=1 // pred_region
      _
    $region5: #{tpu_custom_call.1} parent=1 // pred_fallthru
      _
    // Predicated region
    $region6: #{tpu_custom_call.1} parent=1 // pred_check
      _
    $region7: #{tpu_custom_call.1} parent=1 // pred_check_branch
      %21 = sbr.rel (0) target = $region9
    $region8: #{tpu_custom_call.1} parent=1 // pred_region
      %s23 = ssub.s32 144, 144
      %24 = vsyncadd [#allocation3], %s23
      %s26 = sshll.u32 [#allocation2], 4
      %s27 = int_to_ptr.vmem [resolvable:$true] %s26
      %29 = dma.hbm_to_vmem [thread:$0]  %s1, 144, %s27, [#allocation3]
    $region9: #{tpu_custom_call.1} parent=1 // pred_fallthru
      _
    // Predicated region
    $region10: #{tpu_custom_call.1} parent=1 // pred_check
      _
    $region11: #{tpu_custom_call.1} parent=1 // pred_check_branch
      %31 = sbr.rel (0) target = $region13
    $region12: #{tpu_custom_call.1} parent=1 // pred_region
      _
    $region13: #{tpu_custom_call.1} parent=1 // pred_fallthru
      _
    // Predicated region
    $region14: #{tpu_custom_call.1} parent=1 // pred_check
      _
    $region15: #{tpu_custom_call.1} parent=1 // pred_check_branch
      %33 = sbr.rel (0) target = $region17
    $region16: #{tpu_custom_call.1} parent=1 // pred_region
      _
    $region17: #{tpu_custom_call.1} parent=1 // pred_fallthru
      _
    // Predicated region
    $region18: #{tpu_custom_call.1} parent=1 // pred_check
      _
    $region19: #{tpu_custom_call.1} parent=1 // pred_check_branch
      %35 = sbr.rel (0) target = $region21
    $region20: #{tpu_custom_call.1} parent=1 // pred_region
      _
    $region21: #{tpu_custom_call.1} parent=1 // pred_fallthru
      _
    // Predicated region
    $region22: #{tpu_custom_call.1} parent=1 // pred_check
      _
    $region23: #{tpu_custom_call.1} parent=1 // pred_check_branch
      %37 = sbr.rel (0) target = $region25
    $region24: #{tpu_custom_call.1} parent=1 // pred_region
      %s39 = ssub.s32 256, 256
      %40 = vsyncadd [#allocation6], %s39
      %s41 = sshll.u32 [#allocation5], 4
      %s42 = int_to_ptr.vmem [resolvable:$true] %s41
      %47 = dma.hbm_to_vmem [thread:$0]  %s5, 256, %s42, [#allocation6], 128, 128, 8
    $region25: #{tpu_custom_call.1} parent=1 // pred_fallthru
      _
    // Predicated region
    $region26: #{tpu_custom_call.1} parent=1 // pred_check
      _
    $region27: #{tpu_custom_call.1} parent=1 // pred_check_branch
      %49 = sbr.rel (0) target = $region29
    $region28: #{tpu_custom_call.1} parent=1 // pred_region
      _
    $region29: #{tpu_custom_call.1} parent=1 // pred_fallthru
      _
    // Predicated region
    $region30: #{tpu_custom_call.1} parent=1 // pred_check
      _
    $region31: #{tpu_custom_call.1} parent=1 // pred_check_branch
      %51 = sbr.rel (0) target = $region33
    $region32: #{tpu_custom_call.1} parent=1 // pred_region
      _
    $region33: #{tpu_custom_call.1} parent=1 // pred_fallthru
      _
    // Predicated region
    $region34: #{tpu_custom_call.1} parent=1 // pred_check
      _
    $region35: #{tpu_custom_call.1} parent=1 // pred_check_branch
      %53 = sbr.rel (0) target = $region37
    $region36: #{tpu_custom_call.1} parent=1 // pred_region
      _
    $region37: #{tpu_custom_call.1} parent=1 // pred_fallthru
      _
    // Predicated region
    $region38: #{tpu_custom_call.1} parent=1 // pred_check
      _
    $region39: #{tpu_custom_call.1} parent=1 // pred_check_branch
      %55 = sbr.rel (0) target = $region41
    $region40: #{tpu_custom_call.1} parent=1 // pred_region
      _
    $region41: #{tpu_custom_call.1} parent=1 // pred_fallthru
      _
    // Predicated region
    $region42: #{tpu_custom_call.1} parent=1 // pred_check
      _
    $region43: #{tpu_custom_call.1} parent=1 // pred_check_branch
      %57 = sbr.rel (0) target = $region45
    $region44: #{tpu_custom_call.1} parent=1 // pred_region
      %58 = dma.done [#allocation3], 144
    $region45: #{tpu_custom_call.1} parent=1 // pred_fallthru
      _
    // Predicated region
    $region46: #{tpu_custom_call.1} parent=1 // pred_check
      _
    $region47: #{tpu_custom_call.1} parent=1 // pred_check_branch
      %60 = sbr.rel (0) target = $region49
    $region48: #{tpu_custom_call.1} parent=1 // pred_region
      %61 = dma.done [#allocation6], 256
    $region49: #{tpu_custom_call.1} parent=1 // pred_fallthru
      _
    %v62 = vld [vmem:[%s0] sm:$0xff]
    %v63 = vld [vmem:[%s0 + $0x8] sm:$0xff]
    %v64 = vld [vmem:[%s0 + $0x10] sm:$0xff]
    %v65 = vld [vmem:[%s0 + $0x18] sm:$0xff]
    %v66 = vld [vmem:[%s0 + $0x20] sm:$0xff]
    %v67 = vld [vmem:[%s0 + $0x28] sm:$0xff]
    %v68 = vld [vmem:[%s0 + $0x30] sm:$0xff]
    %v69 = vld [vmem:[%s0 + $0x38] sm:$0xff]
    %v70 = vld [vmem:[%s0 + $0x40] sm:$0xff]
    %v71 = vld [vmem:[%s2] sm:$0xff]
    %v72 = vld [vmem:[%s2 + $0x8] sm:$0xff]
    %vm73 = vcmask 64512
    %v75 = vsel %vm73, %v71, 0
    %v78 = vsel %vm73, %v72, 0
    %80 = vmatprep.subr.mxu0 %v63
    %81 = vmatpush1.msra.mxu0 %v62
    %82 = vmatprep.subr.mxu0 0.0
    %83 = vmatpush1.msra.mxu0 0.0
    %84 = vmatprep.subr.mxu0 0.0
    %85 = vmatpush1.msra.mxu0 0.0
    %86 = vmatprep.subr.mxu0 0.0
    %87 = vmatpush1.msra.mxu0 0.0
    %88 = vmatprep.subr.mxu0 0.0
    %89 = vmatpush1.msra.mxu0 0.0
    %90 = vmatprep.subr.mxu0 0.0
    %91 = vmatpush1.msra.mxu0 0.0
    %92 = vmatprep.subr.mxu0 0.0
    %93 = vmatpush1.msra.mxu0 0.0
    %94 = vmatprep.subr.mxu0 0.0
    %95 = vmatpush1.msra.mxu0 0.0
    %96 = vmatprep.subr.mxu0 0.0
    %97 = vmatpush1.msra.mxu0 0.0
    %98 = vmatprep.subr.mxu0 0.0
    %99 = vmatpush1.msra.mxu0 0.0
    %100 = vmatprep.subr.mxu0 0.0
    %101 = vmatpush1.msra.mxu0 0.0
    %102 = vmatprep.subr.mxu0 0.0
    %103 = vmatpush1.msra.mxu0 0.0
    %104 = vmatprep.subr.mxu0 0.0
    %105 = vmatpush1.msra.mxu0 0.0
    %106 = vmatprep.subr.mxu0 0.0
    %107 = vmatpush1.msra.mxu0 0.0
    %108 = vmatprep.subr.mxu0 0.0
    %109 = vmatpush1.msra.mxu0 0.0
    %110 = vmatprep.subr.mxu0 0.0
    %111 = vmatpush1.msra.mxu0 0.0
    %112 = vmatprep.subr.mxu0 0.0
    %113 = vmatpush1.msra.mxu0 0.0
    %114 = vmatprep.subr.mxu0 0.0
    %115 = vmatpush1.msra.mxu0 0.0
    %116 = vmatprep.subr.mxu0 0.0
    %117 = vmatpush1.msra.mxu0 0.0
    %118 = vmatprep.subr.mxu0 0.0
    %119 = vmatpush1.msra.mxu0 0.0
    %120 = vmatprep.subr.mxu0 0.0
    %121 = vmatpush1.msra.mxu0 0.0
    %122 = vmatprep.subr.mxu0 0.0
    %123 = vmatpush1.msra.mxu0 0.0
    %124 = vmatprep.subr.mxu0 0.0
    %125 = vmatpush1.msra.mxu0 0.0
    %126 = vmatprep.subr.mxu0 0.0
    %127 = vmatpush1.msra.mxu0 0.0
    %128 = vmatprep.subr.mxu0 0.0
    %129 = vmatpush1.msra.mxu0 0.0
    %130 = vmatprep.subr.mxu0 0.0
    %131 = vmatpush1.msra.mxu0 0.0
    %132 = vmatprep.subr.mxu0 0.0
    %133 = vmatpush1.msra.mxu0 0.0
    %134 = vmatprep.subr.mxu0 0.0
    %135 = vmatpush1.msra.mxu0 0.0
    %136 = vmatprep.subr.mxu0 0.0
    %137 = vmatpush1.msra.mxu0 0.0
    %138 = vmatprep.subr.mxu0 0.0
    %139 = vmatpush1.msra.mxu0 0.0
    %140 = vmatprep.subr.mxu0 0.0
    %141 = vmatpush1.msra.mxu0 0.0
    %142 = vmatprep.subr.mxu0 0.0
    %143 = vmatpush1.msra.mxu0 0.0
    %144 = vmatprep.mubr.f32.mxu0 0.0
    %145 = vmatmul.mubr.f32.gmra.mrb[0].mxu0 %v75
    %v146 = vpop.f32.mrb[0].mxu0
    %v147 = vadd.f32 0.0, %v146
    %v148 = vpop.f32.mrb[0].mxu0
    %v149 = vadd.f32 0.0, %v148
    %150 = vmatprep.mubr.f32.mxu0 0.0
    %151 = vmatmul.mubr.f32.gmra.mrb[0].mxu0 %v78
    %v152 = vpop.f32.mrb[0].mxu0
    %v153 = vadd.f32 0.0, %v152
    %v154 = vpop.f32.mrb[0].mxu0
    %v155 = vadd.f32 0.0, %v154
    %156 = vdwg.mxu0
    %157 = vmatprep.subr.mxu0 %v65
    %158 = vmatpush1.msra.mxu0 %v64
    %159 = vmatprep.subr.mxu0 0.0
    %160 = vmatpush1.msra.mxu0 0.0
    %161 = vmatprep.subr.mxu0 0.0
    %162 = vmatpush1.msra.mxu0 0.0
    %163 = vmatprep.subr.mxu0 0.0
    %164 = vmatpush1.msra.mxu0 0.0
    %165 = vmatprep.subr.mxu0 0.0
    %166 = vmatpush1.msra.mxu0 0.0
    %167 = vmatprep.subr.mxu0 0.0
    %168 = vmatpush1.msra.mxu0 0.0
    %169 = vmatprep.subr.mxu0 0.0
    %170 = vmatpush1.msra.mxu0 0.0
    %171 = vmatprep.subr.mxu0 0.0
    %172 = vmatpush1.msra.mxu0 0.0
    %173 = vmatprep.subr.mxu0 0.0
    %174 = vmatpush1.msra.mxu0 0.0
    %175 = vmatprep.subr.mxu0 0.0
    %176 = vmatpush1.msra.mxu0 0.0
    %177 = vmatprep.subr.mxu0 0.0
    %178 = vmatpush1.msra.mxu0 0.0
    %179 = vmatprep.subr.mxu0 0.0
    %180 = vmatpush1.msra.mxu0 0.0
    %181 = vmatprep.subr.mxu0 0.0
    %182 = vmatpush1.msra.mxu0 0.0
    %183 = vmatprep.subr.mxu0 0.0
    %184 = vmatpush1.msra.mxu0 0.0
    %185 = vmatprep.subr.mxu0 0.0
    %186 = vmatpush1.msra.mxu0 0.0
    %187 = vmatprep.subr.mxu0 0.0
    %188 = vmatpush1.msra.mxu0 0.0
    %189 = vmatprep.subr.mxu0 0.0
    %190 = vmatpush1.msra.mxu0 0.0
    %191 = vmatprep.subr.mxu0 0.0
    %192 = vmatpush1.msra.mxu0 0.0
    %193 = vmatprep.subr.mxu0 0.0
    %194 = vmatpush1.msra.mxu0 0.0
    %195 = vmatprep.subr.mxu0 0.0
    %196 = vmatpush1.msra.mxu0 0.0
    %197 = vmatprep.subr.mxu0 0.0
    %198 = vmatpush1.msra.mxu0 0.0
    %199 = vmatprep.subr.mxu0 0.0
    %200 = vmatpush1.msra.mxu0 0.0
    %201 = vmatprep.subr.mxu0 0.0
    %202 = vmatpush1.msra.mxu0 0.0
    %203 = vmatprep.subr.mxu0 0.0
    %204 = vmatpush1.msra.mxu0 0.0
    %205 = vmatprep.subr.mxu0 0.0
    %206 = vmatpush1.msra.mxu0 0.0
    %207 = vmatprep.subr.mxu0 0.0
    %208 = vmatpush1.msra.mxu0 0.0
    %209 = vmatprep.subr.mxu0 0.0
    %210 = vmatpush1.msra.mxu0 0.0
    %211 = vmatprep.subr.mxu0 0.0
    %212 = vmatpush1.msra.mxu0 0.0
    %213 = vmatprep.subr.mxu0 0.0
    %214 = vmatpush1.msra.mxu0 0.0
    %215 = vmatprep.subr.mxu0 0.0
    %216 = vmatpush1.msra.mxu0 0.0
    %217 = vmatprep.subr.mxu0 0.0
    %218 = vmatpush1.msra.mxu0 0.0
    %219 = vmatprep.subr.mxu0 0.0
    %220 = vmatpush1.msra.mxu0 0.0
    %221 = vmatprep.mubr.f32.mxu0 0.0
    %222 = vmatmul.mubr.f32.gmra.mrb[0].mxu0 %v75
    %v223 = vpop.f32.mrb[0].mxu0
    %v224 = vadd.f32 0.0, %v223
    %v225 = vpop.f32.mrb[0].mxu0
    %v226 = vadd.f32 0.0, %v225
    %227 = vmatprep.mubr.f32.mxu0 0.0
    %228 = vmatmul.mubr.f32.gmra.mrb[0].mxu0 %v78
    %v229 = vpop.f32.mrb[0].mxu0
    %v230 = vadd.f32 0.0, %v229
    %v231 = vpop.f32.mrb[0].mxu0
    %v232 = vadd.f32 0.0, %v231
    %233 = vdwg.mxu0
    %234 = vmatprep.subr.mxu0 %v67
    %235 = vmatpush1.msra.mxu0 %v66
    %236 = vmatprep.subr.mxu0 0.0
    %237 = vmatpush1.msra.mxu0 0.0
    %238 = vmatprep.subr.mxu0 0.0
    %239 = vmatpush1.msra.mxu0 0.0
    %240 = vmatprep.subr.mxu0 0.0
    %241 = vmatpush1.msra.mxu0 0.0
    %242 = vmatprep.subr.mxu0 0.0
    %243 = vmatpush1.msra.mxu0 0.0
    %244 = vmatprep.subr.mxu0 0.0
    %245 = vmatpush1.msra.mxu0 0.0
    %246 = vmatprep.subr.mxu0 0.0
    %247 = vmatpush1.msra.mxu0 0.0
    %248 = vmatprep.subr.mxu0 0.0
    %249 = vmatpush1.msra.mxu0 0.0
    %250 = vmatprep.subr.mxu0 0.0
    %251 = vmatpush1.msra.mxu0 0.0
    %252 = vmatprep.subr.mxu0 0.0
    %253 = vmatpush1.msra.mxu0 0.0
    %254 = vmatprep.subr.mxu0 0.0
    %255 = vmatpush1.msra.mxu0 0.0
    %256 = vmatprep.subr.mxu0 0.0
    %257 = vmatpush1.msra.mxu0 0.0
    %258 = vmatprep.subr.mxu0 0.0
    %259 = vmatpush1.msra.mxu0 0.0
    %260 = vmatprep.subr.mxu0 0.0
    %261 = vmatpush1.msra.mxu0 0.0
    %262 = vmatprep.subr.mxu0 0.0
    %263 = vmatpush1.msra.mxu0 0.0
    %264 = vmatprep.subr.mxu0 0.0
    %265 = vmatpush1.msra.mxu0 0.0
    %266 = vmatprep.subr.mxu0 0.0
    %267 = vmatpush1.msra.mxu0 0.0
    %268 = vmatprep.subr.mxu0 0.0
    %269 = vmatpush1.msra.mxu0 0.0
    %270 = vmatprep.subr.mxu0 0.0
    %271 = vmatpush1.msra.mxu0 0.0
    %272 = vmatprep.subr.mxu0 0.0
    %273 = vmatpush1.msra.mxu0 0.0
    %274 = vmatprep.subr.mxu0 0.0
    %275 = vmatpush1.msra.mxu0 0.0
    %276 = vmatprep.subr.mxu0 0.0
    %277 = vmatpush1.msra.mxu0 0.0
    %278 = vmatprep.subr.mxu0 0.0
    %279 = vmatpush1.msra.mxu0 0.0
    %280 = vmatprep.subr.mxu0 0.0
    %281 = vmatpush1.msra.mxu0 0.0
    %282 = vmatprep.subr.mxu0 0.0
    %283 = vmatpush1.msra.mxu0 0.0
    %284 = vmatprep.subr.mxu0 0.0
    %285 = vmatpush1.msra.mxu0 0.0
    %286 = vmatprep.subr.mxu0 0.0
    %287 = vmatpush1.msra.mxu0 0.0
    %288 = vmatprep.subr.mxu0 0.0
    %289 = vmatpush1.msra.mxu0 0.0
    %290 = vmatprep.subr.mxu0 0.0
    %291 = vmatpush1.msra.mxu0 0.0
    %292 = vmatprep.subr.mxu0 0.0
    %293 = vmatpush1.msra.mxu0 0.0
    %294 = vmatprep.subr.mxu0 0.0
    %295 = vmatpush1.msra.mxu0 0.0
    %296 = vmatprep.subr.mxu0 0.0
    %297 = vmatpush1.msra.mxu0 0.0
    %298 = vmatprep.mubr.f32.mxu0 0.0
    %299 = vmatmul.mubr.f32.gmra.mrb[0].mxu0 %v75
    %v300 = vpop.f32.mrb[0].mxu0
    %v301 = vadd.f32 0.0, %v300
    %v302 = vpop.f32.mrb[0].mxu0
    %v303 = vadd.f32 0.0, %v302
    %304 = vmatprep.mubr.f32.mxu0 0.0
    %305 = vmatmul.mubr.f32.gmra.mrb[0].mxu0 %v78
    %v306 = vpop.f32.mrb[0].mxu0
    %v307 = vadd.f32 0.0, %v306
    %v308 = vpop.f32.mrb[0].mxu0
    %v309 = vadd.f32 0.0, %v308
    %310 = vdwg.mxu0
    %311 = vmatprep.subr.mxu0 %v69
    %312 = vmatpush1.msra.mxu0 %v68
    %313 = vmatprep.subr.mxu0 0.0
    %314 = vmatpush1.msra.mxu0 0.0
    %315 = vmatprep.subr.mxu0 0.0
    %316 = vmatpush1.msra.mxu0 0.0
    %317 = vmatprep.subr.mxu0 0.0
    %318 = vmatpush1.msra.mxu0 0.0
    %319 = vmatprep.subr.mxu0 0.0
    %320 = vmatpush1.msra.mxu0 0.0
    %321 = vmatprep.subr.mxu0 0.0
    %322 = vmatpush1.msra.mxu0 0.0
    %323 = vmatprep.subr.mxu0 0.0
    %324 = vmatpush1.msra.mxu0 0.0
    %325 = vmatprep.subr.mxu0 0.0
    %326 = vmatpush1.msra.mxu0 0.0
    %327 = vmatprep.subr.mxu0 0.0
    %328 = vmatpush1.msra.mxu0 0.0
    %329 = vmatprep.subr.mxu0 0.0
    %330 = vmatpush1.msra.mxu0 0.0
    %331 = vmatprep.subr.mxu0 0.0
    %332 = vmatpush1.msra.mxu0 0.0
    %333 = vmatprep.subr.mxu0 0.0
    %334 = vmatpush1.msra.mxu0 0.0
    %335 = vmatprep.subr.mxu0 0.0
    %336 = vmatpush1.msra.mxu0 0.0
    %337 = vmatprep.subr.mxu0 0.0
    %338 = vmatpush1.msra.mxu0 0.0
    %339 = vmatprep.subr.mxu0 0.0
    %340 = vmatpush1.msra.mxu0 0.0
    %341 = vmatprep.subr.mxu0 0.0
    %342 = vmatpush1.msra.mxu0 0.0
    %343 = vmatprep.subr.mxu0 0.0
    %344 = vmatpush1.msra.mxu0 0.0
    %345 = vmatprep.subr.mxu0 0.0
    %346 = vmatpush1.msra.mxu0 0.0
    %347 = vmatprep.subr.mxu0 0.0
    %348 = vmatpush1.msra.mxu0 0.0
    %349 = vmatprep.subr.mxu0 0.0
    %350 = vmatpush1.msra.mxu0 0.0
    %351 = vmatprep.subr.mxu0 0.0
    %352 = vmatpush1.msra.mxu0 0.0
    %353 = vmatprep.subr.mxu0 0.0
    %354 = vmatpush1.msra.mxu0 0.0
    %355 = vmatprep.subr.mxu0 0.0
    %356 = vmatpush1.msra.mxu0 0.0
    %357 = vmatprep.subr.mxu0 0.0
    %358 = vmatpush1.msra.mxu0 0.0
    %359 = vmatprep.subr.mxu0 0.0
    %360 = vmatpush1.msra.mxu0 0.0
    %361 = vmatprep.subr.mxu0 0.0
    %362 = vmatpush1.msra.mxu0 0.0
    %363 = vmatprep.subr.mxu0 0.0
    %364 = vmatpush1.msra.mxu0 0.0
    %365 = vmatprep.subr.mxu0 0.0
    %366 = vmatpush1.msra.mxu0 0.0
    %367 = vmatprep.subr.mxu0 0.0
    %368 = vmatpush1.msra.mxu0 0.0
    %369 = vmatprep.subr.mxu0 0.0
    %370 = vmatpush1.msra.mxu0 0.0
    %371 = vmatprep.subr.mxu0 0.0
    %372 = vmatpush1.msra.mxu0 0.0
    %373 = vmatprep.subr.mxu0 0.0
    %374 = vmatpush1.msra.mxu0 0.0
    %375 = vmatprep.mubr.f32.mxu0 0.0
    %376 = vmatmul.mubr.f32.gmra.mrb[0].mxu0 %v75
    %v377 = vpop.f32.mrb[0].mxu0
    %v378 = vadd.f32 0.0, %v377
    %v379 = vpop.f32.mrb[0].mxu0
    %v380 = vadd.f32 0.0, %v379
    %381 = vmatprep.mubr.f32.mxu0 0.0
    %382 = vmatmul.mubr.f32.gmra.mrb[0].mxu0 %v78
    %v383 = vpop.f32.mrb[0].mxu0
    %v384 = vadd.f32 0.0, %v383
    %v385 = vpop.f32.mrb[0].mxu0
    %v386 = vadd.f32 0.0, %v385
    %387 = vdwg.mxu0
    %388 = vmatprep.subr.mxu0 0.0
    %389 = vmatpush1.msra.mxu0 %v70
    %390 = vmatprep.subr.mxu0 0.0
    %391 = vmatpush1.msra.mxu0 0.0
    %392 = vmatprep.subr.mxu0 0.0
    %393 = vmatpush1.msra.mxu0 0.0
    %394 = vmatprep.subr.mxu0 0.0
    %395 = vmatpush1.msra.mxu0 0.0
    %396 = vmatprep.subr.mxu0 0.0
    %397 = vmatpush1.msra.mxu0 0.0
    %398 = vmatprep.subr.mxu0 0.0
    %399 = vmatpush1.msra.mxu0 0.0
    %400 = vmatprep.subr.mxu0 0.0
    %401 = vmatpush1.msra.mxu0 0.0
    %402 = vmatprep.subr.mxu0 0.0
    %403 = vmatpush1.msra.mxu0 0.0
    %404 = vmatprep.subr.mxu0 0.0
    %405 = vmatpush1.msra.mxu0 0.0
    %406 = vmatprep.subr.mxu0 0.0
    %407 = vmatpush1.msra.mxu0 0.0
    %408 = vmatprep.subr.mxu0 0.0
    %409 = vmatpush1.msra.mxu0 0.0
    %410 = vmatprep.subr.mxu0 0.0
    %411 = vmatpush1.msra.mxu0 0.0
    %412 = vmatprep.subr.mxu0 0.0
    %413 = vmatpush1.msra.mxu0 0.0
    %414 = vmatprep.subr.mxu0 0.0
    %415 = vmatpush1.msra.mxu0 0.0
    %416 = vmatprep.subr.mxu0 0.0
    %417 = vmatpush1.msra.mxu0 0.0
    %418 = vmatprep.subr.mxu0 0.0
    %419 = vmatpush1.msra.mxu0 0.0
    %420 = vmatprep.subr.mxu0 0.0
    %421 = vmatpush1.msra.mxu0 0.0
    %422 = vmatprep.subr.mxu0 0.0
    %423 = vmatpush1.msra.mxu0 0.0
    %424 = vmatprep.subr.mxu0 0.0
    %425 = vmatpush1.msra.mxu0 0.0
    %426 = vmatprep.subr.mxu0 0.0
    %427 = vmatpush1.msra.mxu0 0.0
    %428 = vmatprep.subr.mxu0 0.0
    %429 = vmatpush1.msra.mxu0 0.0
    %430 = vmatprep.subr.mxu0 0.0
    %431 = vmatpush1.msra.mxu0 0.0
    %432 = vmatprep.subr.mxu0 0.0
    %433 = vmatpush1.msra.mxu0 0.0
    %434 = vmatprep.subr.mxu0 0.0
    %435 = vmatpush1.msra.mxu0 0.0
    %436 = vmatprep.subr.mxu0 0.0
    %437 = vmatpush1.msra.mxu0 0.0
    %438 = vmatprep.subr.mxu0 0.0
    %439 = vmatpush1.msra.mxu0 0.0
    %440 = vmatprep.subr.mxu0 0.0
    %441 = vmatpush1.msra.mxu0 0.0
    %442 = vmatprep.subr.mxu0 0.0
    %443 = vmatpush1.msra.mxu0 0.0
    %444 = vmatprep.subr.mxu0 0.0
    %445 = vmatpush1.msra.mxu0 0.0
    %446 = vmatprep.subr.mxu0 0.0
    %447 = vmatpush1.msra.mxu0 0.0
    %448 = vmatprep.subr.mxu0 0.0
    %449 = vmatpush1.msra.mxu0 0.0
    %450 = vmatprep.subr.mxu0 0.0
    %451 = vmatpush1.msra.mxu0 0.0
    %452 = vmatprep.mubr.f32.mxu0 0.0
    %453 = vmatmul.mubr.f32.gmra.mrb[0].mxu0 %v75
    %v454 = vpop.f32.mrb[0].mxu0
    %v455 = vadd.f32 0.0, %v454
    %v456 = vpop.f32.mrb[0].mxu0
    %457 = vmatprep.mubr.f32.mxu0 0.0
    %458 = vmatmul.mubr.f32.gmra.mrb[0].mxu0 %v78
    %v459 = vpop.f32.mrb[0].mxu0
    %v460 = vadd.f32 0.0, %v459
    %v461 = vpop.f32.mrb[0].mxu0
    %462 = vdwg.mxu0
    %v463 = vadd.f32 %v147, %v149
    %v464 = vadd.f32 %v463, %v224
    %v465 = vadd.f32 %v464, %v226
    %v466 = vadd.f32 %v465, %v301
    %v467 = vadd.f32 %v466, %v303
    %v468 = vadd.f32 %v467, %v378
    %v469 = vadd.f32 %v468, %v380
    %v470 = vadd.f32 %v469, %v455
    %471 = vadd.xlane.f32.xlu0 %v470
    %v472 = vpop.xlane.xlu0 %471
    %v473 = vadd.f32 %v153, %v155
    %v474 = vadd.f32 %v473, %v230
    %v475 = vadd.f32 %v474, %v232
    %v476 = vadd.f32 %v475, %v307
    %v477 = vadd.f32 %v476, %v309
    %v478 = vadd.f32 %v477, %v384
    %v479 = vadd.f32 %v478, %v386
    %v480 = vadd.f32 %v479, %v460
    %481 = vadd.xlane.f32.xlu0 %v480
    %v482 = vpop.xlane.xlu0 %481
    %v483 = vmul.f32 %v472, 0.001953125
    %v484 = vmul.f32 %v482, 0.001953125
    %v485 = vmul.f32 %v147, %v147
    %v486 = vmul.f32 %v149, %v149
    %v487 = vmul.f32 %v224, %v224
    %v488 = vmul.f32 %v226, %v226
    %v489 = vmul.f32 %v301, %v301
    %v490 = vmul.f32 %v303, %v303
    %v491 = vmul.f32 %v378, %v378
    %v492 = vmul.f32 %v380, %v380
    %v493 = vmul.f32 %v455, %v455
    %v494 = vmul.f32 %v153, %v153
    %v495 = vmul.f32 %v155, %v155
    %v496 = vmul.f32 %v230, %v230
    %v497 = vmul.f32 %v232, %v232
    %v498 = vmul.f32 %v307, %v307
    %v499 = vmul.f32 %v309, %v309
    %v500 = vmul.f32 %v384, %v384
    %v501 = vmul.f32 %v386, %v386
    %v502 = vmul.f32 %v460, %v460
    %v503 = vadd.f32 %v485, %v486
    %v504 = vadd.f32 %v503, %v487
    %v505 = vadd.f32 %v504, %v488
    %v506 = vadd.f32 %v505, %v489
    %v507 = vadd.f32 %v506, %v490
    %v508 = vadd.f32 %v507, %v491
    %v509 = vadd.f32 %v508, %v492
    %v510 = vadd.f32 %v509, %v493
    %511 = vadd.xlane.f32.xlu0 %v510
    %v512 = vpop.xlane.xlu0 %511
    %v513 = vadd.f32 %v494, %v495
    %v514 = vadd.f32 %v513, %v496
    %v515 = vadd.f32 %v514, %v497
    %v516 = vadd.f32 %v515, %v498
    %v517 = vadd.f32 %v516, %v499
    %v518 = vadd.f32 %v517, %v500
    %v519 = vadd.f32 %v518, %v501
    %v520 = vadd.f32 %v519, %v502
    %521 = vadd.xlane.f32.xlu0 %v520
    %v522 = vpop.xlane.xlu0 %521
    %v523 = vmul.f32 %v512, 0.001953125
    %v524 = vmul.f32 %v522, 0.001953125
    %v525 = vmul.f32 %v483, %v483
    %v526 = vmul.f32 %v484, %v484
    %v527 = vsub.f32 %v523, %v525
    %v528 = vsub.f32 %v524, %v526
    %v529 = vld [vmem:[%s3] sm:$0xff]
    %v530 = vld [vmem:[%s3 + $0x8] sm:$0xff]
    %v531 = vadd.f32 %v527, 1e-05
    %v532 = vadd.f32 %v528, 1e-05
    %v533 = vrsqrt.pop %v531
    %v534 = vrsqrt.pop %v532
    %v535 = vmul.f32 %v529, %v533
    %v536 = vmul.f32 %v530, %v534
    %538 = vset.pattern.permute.xlu0 0
    %539 = vperm.xlu0 %538, %v535
    %v540 = vpop.permute.xlu0 %539
    %543 = vset.pattern.permute.xlu0 0
    %544 = vperm.xlu0 %543, %v536
    %v545 = vpop.permute.xlu0 %544
    %v547 = vmul.f32 %v147, %v540
    %v548 = vmul.f32 %v149, %v540
    %v549 = vmul.f32 %v224, %v540
    %v550 = vmul.f32 %v226, %v540
    %v551 = vmul.f32 %v301, %v540
    %v552 = vmul.f32 %v303, %v540
    %v553 = vmul.f32 %v378, %v540
    %v554 = vmul.f32 %v380, %v540
    %v555 = vmul.f32 %v455, %v540
    %v556 = vmul.f32 %v153, %v545
    %v557 = vmul.f32 %v155, %v545
    %v558 = vmul.f32 %v230, %v545
    %v559 = vmul.f32 %v232, %v545
    %v560 = vmul.f32 %v307, %v545
    %v561 = vmul.f32 %v309, %v545
    %v562 = vmul.f32 %v384, %v545
    %v563 = vmul.f32 %v386, %v545
    %v564 = vmul.f32 %v460, %v545
    %v565 = vld [vmem:[%s4] sm:$0xff]
    %v566 = vld [vmem:[%s4 + $0x8] sm:$0xff]
    %v567 = vmul.f32 %v483, %v535
    %v568 = vmul.f32 %v484, %v536
    %v569 = vsub.f32 %v565, %v567
    %v570 = vsub.f32 %v566, %v568
    %572 = vset.pattern.permute.xlu0 0
    %573 = vperm.xlu0 %572, %v569
    %v574 = vpop.permute.xlu0 %573
    %577 = vset.pattern.permute.xlu0 0
    %578 = vperm.xlu0 %577, %v570
    %v579 = vpop.permute.xlu0 %578
    %v581 = vadd.f32 %v547, %v574
    %v582 = vadd.f32 %v548, %v574
    %v583 = vadd.f32 %v549, %v574
    %v584 = vadd.f32 %v550, %v574
    %v585 = vadd.f32 %v551, %v574
    %v586 = vadd.f32 %v552, %v574
    %v587 = vadd.f32 %v553, %v574
    %v588 = vadd.f32 %v554, %v574
    %v589 = vadd.f32 %v555, %v574
    %v590 = vadd.f32 %v556, %v579
    %v591 = vadd.f32 %v557, %v579
    %v592 = vadd.f32 %v558, %v579
    %v593 = vadd.f32 %v559, %v579
    %v594 = vadd.f32 %v560, %v579
    %v595 = vadd.f32 %v561, %v579
    %v596 = vadd.f32 %v562, %v579
    %v597 = vadd.f32 %v563, %v579
    %v598 = vadd.f32 %v564, %v579
    %v599 = vmax.f32 %v581, 0.0
    %v600 = vmax.f32 %v582, 0.0
    %v601 = vmax.f32 %v583, 0.0
    %v602 = vmax.f32 %v584, 0.0
    %v603 = vmax.f32 %v585, 0.0
    %v604 = vmax.f32 %v586, 0.0
    %v605 = vmax.f32 %v587, 0.0
    %v606 = vmax.f32 %v588, 0.0
    %v607 = vmax.f32 %v589, 0.0
    %v608 = vmax.f32 %v590, 0.0
    %v609 = vmax.f32 %v591, 0.0
    %v610 = vmax.f32 %v592, 0.0
    %v611 = vmax.f32 %v593, 0.0
    %v612 = vmax.f32 %v594, 0.0
    %v613 = vmax.f32 %v595, 0.0
    %v614 = vmax.f32 %v596, 0.0
    %v615 = vmax.f32 %v597, 0.0
    %v616 = vmax.f32 %v598, 0.0
    %v617 = vld [vmem:[#allocation2] sm:$0xff]
    %v618 = vld [vmem:[#allocation2 + $0x8] sm:$0x1]
    %v621 = vlaneseq
    %v622 = vshrl.u32 %v621, 7
    %v623 = vsub.s32 0, %v622
    %v624 = vrot.slane %v617, %v623
    %v625 = vlaneseq
    %v626 = vshrl.u32 %v625, 7
    %v627 = vsub.s32 1, %v626
    %v628 = vrot.slane %v617, %v627
    %v629 = vlaneseq
    %v630 = vshrl.u32 %v629, 7
    %v631 = vsub.s32 2, %v630
    %v632 = vrot.slane %v617, %v631
    %v633 = vlaneseq
    %v634 = vshrl.u32 %v633, 7
    %v635 = vsub.s32 3, %v634
    %v636 = vrot.slane %v617, %v635
    %v637 = vlaneseq
    %v638 = vshrl.u32 %v637, 7
    %v639 = vsub.s32 4, %v638
    %v640 = vrot.slane %v617, %v639
    %v641 = vlaneseq
    %v642 = vshrl.u32 %v641, 7
    %v643 = vsub.s32 5, %v642
    %v644 = vrot.slane %v617, %v643
    %v645 = vlaneseq
    %v646 = vshrl.u32 %v645, 7
    %v647 = vsub.s32 6, %v646
    %v648 = vrot.slane %v617, %v647
    %v649 = vlaneseq
    %v650 = vshrl.u32 %v649, 7
    %v651 = vsub.s32 7, %v650
    %v652 = vrot.slane %v617, %v651
    %v653 = vlaneseq
    %v654 = vshrl.u32 %v653, 7
    %v655 = vsub.s32 0, %v654
    %v656 = vrot.slane %v618, %v655
    %v666 = vmul.f32 %v599, %v624
    %v667 = vmul.f32 %v600, %v628
    %v668 = vmul.f32 %v601, %v632
    %v669 = vmul.f32 %v602, %v636
    %v670 = vmul.f32 %v603, %v640
    %v671 = vmul.f32 %v604, %v644
    %v672 = vmul.f32 %v605, %v648
    %v673 = vmul.f32 %v606, %v652
    %v674 = vmul.f32 %v607, %v656
    %v675 = vmul.f32 %v608, %v624
    %v676 = vmul.f32 %v609, %v628
    %v677 = vmul.f32 %v610, %v632
    %v678 = vmul.f32 %v611, %v636
    %v679 = vmul.f32 %v612, %v640
    %v680 = vmul.f32 %v613, %v644
    %v681 = vmul.f32 %v614, %v648
    %v682 = vmul.f32 %v615, %v652
    %v683 = vmul.f32 %v616, %v656
    %684 = vrot.lane.b32.xlu0 %v666, 1
    %v685 = vpop.permute.xlu0 %684
    %686 = vrot.lane.b32.xlu0 %v675, 1
    %v687 = vpop.permute.xlu0 %686
    %688 = vrot.lane.b32.xlu0 %v667, 1
    %v689 = vpop.permute.xlu0 %688
    %690 = vrot.lane.b32.xlu0 %v676, 1
    %v691 = vpop.permute.xlu0 %690
    %692 = vrot.lane.b32.xlu0 %v668, 1
    %v693 = vpop.permute.xlu0 %692
    %694 = vrot.lane.b32.xlu0 %v677, 1
    %v695 = vpop.permute.xlu0 %694
    %696 = vrot.lane.b32.xlu0 %v669, 1
    %v697 = vpop.permute.xlu0 %696
    %698 = vrot.lane.b32.xlu0 %v678, 1
    %v699 = vpop.permute.xlu0 %698
    %700 = vrot.lane.b32.xlu0 %v670, 1
    %v701 = vpop.permute.xlu0 %700
    %702 = vrot.lane.b32.xlu0 %v679, 1
    %v703 = vpop.permute.xlu0 %702
    %704 = vrot.lane.b32.xlu0 %v671, 1
    %v705 = vpop.permute.xlu0 %704
    %706 = vrot.lane.b32.xlu0 %v680, 1
    %v707 = vpop.permute.xlu0 %706
    %708 = vrot.lane.b32.xlu0 %v672, 1
    %v709 = vpop.permute.xlu0 %708
    %710 = vrot.lane.b32.xlu0 %v681, 1
    %v711 = vpop.permute.xlu0 %710
    %712 = vrot.lane.b32.xlu0 %v673, 1
    %v713 = vpop.permute.xlu0 %712
    %714 = vrot.lane.b32.xlu0 %v682, 1
    %v715 = vpop.permute.xlu0 %714
    %716 = vrot.lane.b32.xlu0 %v674, 1
    %v717 = vpop.permute.xlu0 %716
    %718 = vrot.lane.b32.xlu0 %v683, 1
    %v719 = vpop.permute.xlu0 %718
    %v720 = vlaneseq
    %v721 = vand.u32 %v720, 127
    %vm722 = vcmp.lt.s32.totalorder %v721, 1
    %v723 = vsel %vm722, %v713, %v717
    %v724 = vsel %vm722, %v715, %v719
    %v725 = vsel %vm722, %v709, %v713
    %v726 = vsel %vm722, %v711, %v715
    %v727 = vsel %vm722, %v705, %v709
    %v728 = vsel %vm722, %v707, %v711
    %v729 = vsel %vm722, %v701, %v705
    %v730 = vsel %vm722, %v703, %v707
    %v731 = vsel %vm722, %v697, %v701
    %v732 = vsel %vm722, %v699, %v703
    %v733 = vsel %vm722, %v693, %v697
    %v734 = vsel %vm722, %v695, %v699
    %v735 = vsel %vm722, %v689, %v693
    %v736 = vsel %vm722, %v691, %v695
    %v737 = vsel %vm722, %v685, %v689
    %v738 = vsel %vm722, %v687, %v691
    %v739 = vsel %vm722, %v717, %v685
    %v740 = vsel %vm722, %v719, %v687
    %v741 = vld [vmem:[#allocation5] sm:$0xff]
    %v742 = vld [vmem:[#allocation5 + $0x8] sm:$0xff]
    %vm743 = vcmask 261120
    %v745 = vsel %vm743, %v741, 0
    %v748 = vsel %vm743, %v742, 0
    %750 = vmatprep.subr.mxu0 %v667
    %751 = vmatpush1.msra.mxu0 %v666
    %752 = vmatprep.subr.mxu0 %v676
    %753 = vmatpush1.msra.mxu0 %v675
    %754 = vmatprep.subr.mxu0 %v737
    %755 = vmatpush1.msra.mxu0 %v739
    %756 = vmatprep.subr.mxu0 %v738
    %757 = vmatpush1.msra.mxu0 %v740
    %758 = vmatprep.subr.mxu0 0.0
    %759 = vmatpush1.msra.mxu0 0.0
    %760 = vmatprep.subr.mxu0 0.0
    %761 = vmatpush1.msra.mxu0 0.0
    %762 = vmatprep.subr.mxu0 0.0
    %763 = vmatpush1.msra.mxu0 0.0
    %764 = vmatprep.subr.mxu0 0.0
    %765 = vmatpush1.msra.mxu0 0.0
    %766 = vmatprep.subr.mxu0 0.0
    %767 = vmatpush1.msra.mxu0 0.0
    %768 = vmatprep.subr.mxu0 0.0
    %769 = vmatpush1.msra.mxu0 0.0
    %770 = vmatprep.subr.mxu0 0.0
    %771 = vmatpush1.msra.mxu0 0.0
    %772 = vmatprep.subr.mxu0 0.0
    %773 = vmatpush1.msra.mxu0 0.0
    %774 = vmatprep.subr.mxu0 0.0
    %775 = vmatpush1.msra.mxu0 0.0
    %776 = vmatprep.subr.mxu0 0.0
    %777 = vmatpush1.msra.mxu0 0.0
    %778 = vmatprep.subr.mxu0 0.0
    %779 = vmatpush1.msra.mxu0 0.0
    %780 = vmatprep.subr.mxu0 0.0
    %781 = vmatpush1.msra.mxu0 0.0
    %782 = vmatprep.subr.mxu0 0.0
    %783 = vmatpush1.msra.mxu0 0.0
    %784 = vmatprep.subr.mxu0 0.0
    %785 = vmatpush1.msra.mxu0 0.0
    %786 = vmatprep.subr.mxu0 0.0
    %787 = vmatpush1.msra.mxu0 0.0
    %788 = vmatprep.subr.mxu0 0.0
    %789 = vmatpush1.msra.mxu0 0.0
    %790 = vmatprep.subr.mxu0 0.0
    %791 = vmatpush1.msra.mxu0 0.0
    %792 = vmatprep.subr.mxu0 0.0
    %793 = vmatpush1.msra.mxu0 0.0
    %794 = vmatprep.subr.mxu0 0.0
    %795 = vmatpush1.msra.mxu0 0.0
    %796 = vmatprep.subr.mxu0 0.0
    %797 = vmatpush1.msra.mxu0 0.0
    %798 = vmatprep.subr.mxu0 0.0
    %799 = vmatpush1.msra.mxu0 0.0
    %800 = vmatprep.subr.mxu0 0.0
    %801 = vmatpush1.msra.mxu0 0.0
    %802 = vmatprep.subr.mxu0 0.0
    %803 = vmatpush1.msra.mxu0 0.0
    %804 = vmatprep.subr.mxu0 0.0
    %805 = vmatpush1.msra.mxu0 0.0
    %806 = vmatprep.subr.mxu0 0.0
    %807 = vmatpush1.msra.mxu0 0.0
    %808 = vmatprep.subr.mxu0 0.0
    %809 = vmatpush1.msra.mxu0 0.0
    %810 = vmatprep.subr.mxu0 0.0
    %811 = vmatpush1.msra.mxu0 0.0
    %812 = vmatprep.subr.mxu0 0.0
    %813 = vmatpush1.msra.mxu0 0.0
    %814 = vmatprep.mubr.f32.mxu0 0.0
    %815 = vmatmul.mubr.f32.gmra.mrb[0].mxu0 %v745
    %v816 = vpop.f32.mrb[0].mxu0
    %v817 = vadd.f32 0.0, %v816
    %v818 = vpop.f32.mrb[0].mxu0
    %v819 = vadd.f32 0.0, %v818
    %820 = vmatprep.mubr.f32.mxu0 0.0
    %821 = vmatmul.mubr.f32.gmra.mrb[0].mxu0 %v748
    %v822 = vpop.f32.mrb[0].mxu0
    %v823 = vadd.f32 0.0, %v822
    %v824 = vpop.f32.mrb[0].mxu0
    %v825 = vadd.f32 0.0, %v824
    %826 = vdwg.mxu0
    %827 = vmatprep.subr.mxu0 %v669
    %828 = vmatpush1.msra.mxu0 %v668
    %829 = vmatprep.subr.mxu0 %v678
    %830 = vmatpush1.msra.mxu0 %v677
    %831 = vmatprep.subr.mxu0 %v733
    %832 = vmatpush1.msra.mxu0 %v735
    %833 = vmatprep.subr.mxu0 %v734
    %834 = vmatpush1.msra.mxu0 %v736
    %835 = vmatprep.subr.mxu0 0.0
    %836 = vmatpush1.msra.mxu0 0.0
    %837 = vmatprep.subr.mxu0 0.0
    %838 = vmatpush1.msra.mxu0 0.0
    %839 = vmatprep.subr.mxu0 0.0
    %840 = vmatpush1.msra.mxu0 0.0
    %841 = vmatprep.subr.mxu0 0.0
    %842 = vmatpush1.msra.mxu0 0.0
    %843 = vmatprep.subr.mxu0 0.0
    %844 = vmatpush1.msra.mxu0 0.0
    %845 = vmatprep.subr.mxu0 0.0
    %846 = vmatpush1.msra.mxu0 0.0
    %847 = vmatprep.subr.mxu0 0.0
    %848 = vmatpush1.msra.mxu0 0.0
    %849 = vmatprep.subr.mxu0 0.0
    %850 = vmatpush1.msra.mxu0 0.0
    %851 = vmatprep.subr.mxu0 0.0
    %852 = vmatpush1.msra.mxu0 0.0
    %853 = vmatprep.subr.mxu0 0.0
    %854 = vmatpush1.msra.mxu0 0.0
    %855 = vmatprep.subr.mxu0 0.0
    %856 = vmatpush1.msra.mxu0 0.0
    %857 = vmatprep.subr.mxu0 0.0
    %858 = vmatpush1.msra.mxu0 0.0
    %859 = vmatprep.subr.mxu0 0.0
    %860 = vmatpush1.msra.mxu0 0.0
    %861 = vmatprep.subr.mxu0 0.0
    %862 = vmatpush1.msra.mxu0 0.0
    %863 = vmatprep.subr.mxu0 0.0
    %864 = vmatpush1.msra.mxu0 0.0
    %865 = vmatprep.subr.mxu0 0.0
    %866 = vmatpush1.msra.mxu0 0.0
    %867 = vmatprep.subr.mxu0 0.0
    %868 = vmatpush1.msra.mxu0 0.0
    %869 = vmatprep.subr.mxu0 0.0
    %870 = vmatpush1.msra.mxu0 0.0
    %871 = vmatprep.subr.mxu0 0.0
    %872 = vmatpush1.msra.mxu0 0.0
    %873 = vmatprep.subr.mxu0 0.0
    %874 = vmatpush1.msra.mxu0 0.0
    %875 = vmatprep.subr.mxu0 0.0
    %876 = vmatpush1.msra.mxu0 0.0
    %877 = vmatprep.subr.mxu0 0.0
    %878 = vmatpush1.msra.mxu0 0.0
    %879 = vmatprep.subr.mxu0 0.0
    %880 = vmatpush1.msra.mxu0 0.0
    %881 = vmatprep.subr.mxu0 0.0
    %882 = vmatpush1.msra.mxu0 0.0
    %883 = vmatprep.subr.mxu0 0.0
    %884 = vmatpush1.msra.mxu0 0.0
    %885 = vmatprep.subr.mxu0 0.0
    %886 = vmatpush1.msra.mxu0 0.0
    %887 = vmatprep.subr.mxu0 0.0
    %888 = vmatpush1.msra.mxu0 0.0
    %889 = vmatprep.subr.mxu0 0.0
    %890 = vmatpush1.msra.mxu0 0.0
    %891 = vmatprep.mubr.f32.mxu0 0.0
    %892 = vmatmul.mubr.f32.gmra.mrb[0].mxu0 %v745
    %v893 = vpop.f32.mrb[0].mxu0
    %v894 = vadd.f32 0.0, %v893
    %v895 = vpop.f32.mrb[0].mxu0
    %v896 = vadd.f32 0.0, %v895
    %897 = vmatprep.mubr.f32.mxu0 0.0
    %898 = vmatmul.mubr.f32.gmra.mrb[0].mxu0 %v748
    %v899 = vpop.f32.mrb[0].mxu0
    %v900 = vadd.f32 0.0, %v899
    %v901 = vpop.f32.mrb[0].mxu0
    %v902 = vadd.f32 0.0, %v901
    %903 = vdwg.mxu0
    %904 = vmatprep.subr.mxu0 %v671
    %905 = vmatpush1.msra.mxu0 %v670
    %906 = vmatprep.subr.mxu0 %v680
    %907 = vmatpush1.msra.mxu0 %v679
    %908 = vmatprep.subr.mxu0 %v729
    %909 = vmatpush1.msra.mxu0 %v731
    %910 = vmatprep.subr.mxu0 %v730
    %911 = vmatpush1.msra.mxu0 %v732
    %912 = vmatprep.subr.mxu0 0.0
    %913 = vmatpush1.msra.mxu0 0.0
    %914 = vmatprep.subr.mxu0 0.0
    %915 = vmatpush1.msra.mxu0 0.0
    %916 = vmatprep.subr.mxu0 0.0
    %917 = vmatpush1.msra.mxu0 0.0
    %918 = vmatprep.subr.mxu0 0.0
    %919 = vmatpush1.msra.mxu0 0.0
    %920 = vmatprep.subr.mxu0 0.0
    %921 = vmatpush1.msra.mxu0 0.0
    %922 = vmatprep.subr.mxu0 0.0
    %923 = vmatpush1.msra.mxu0 0.0
    %924 = vmatprep.subr.mxu0 0.0
    %925 = vmatpush1.msra.mxu0 0.0
    %926 = vmatprep.subr.mxu0 0.0
    %927 = vmatpush1.msra.mxu0 0.0
    %928 = vmatprep.subr.mxu0 0.0
    %929 = vmatpush1.msra.mxu0 0.0
    %930 = vmatprep.subr.mxu0 0.0
    %931 = vmatpush1.msra.mxu0 0.0
    %932 = vmatprep.subr.mxu0 0.0
    %933 = vmatpush1.msra.mxu0 0.0
    %934 = vmatprep.subr.mxu0 0.0
    %935 = vmatpush1.msra.mxu0 0.0
    %936 = vmatprep.subr.mxu0 0.0
    %937 = vmatpush1.msra.mxu0 0.0
    %938 = vmatprep.subr.mxu0 0.0
    %939 = vmatpush1.msra.mxu0 0.0
    %940 = vmatprep.subr.mxu0 0.0
    %941 = vmatpush1.msra.mxu0 0.0
    %942 = vmatprep.subr.mxu0 0.0
    %943 = vmatpush1.msra.mxu0 0.0
    %944 = vmatprep.subr.mxu0 0.0
    %945 = vmatpush1.msra.mxu0 0.0
    %946 = vmatprep.subr.mxu0 0.0
    %947 = vmatpush1.msra.mxu0 0.0
    %948 = vmatprep.subr.mxu0 0.0
    %949 = vmatpush1.msra.mxu0 0.0
    %950 = vmatprep.subr.mxu0 0.0
    %951 = vmatpush1.msra.mxu0 0.0
    %952 = vmatprep.subr.mxu0 0.0
    %953 = vmatpush1.msra.mxu0 0.0
    %954 = vmatprep.subr.mxu0 0.0
    %955 = vmatpush1.msra.mxu0 0.0
    %956 = vmatprep.subr.mxu0 0.0
    %957 = vmatpush1.msra.mxu0 0.0
    %958 = vmatprep.subr.mxu0 0.0
    %959 = vmatpush1.msra.mxu0 0.0
    %960 = vmatprep.subr.mxu0 0.0
    %961 = vmatpush1.msra.mxu0 0.0
    %962 = vmatprep.subr.mxu0 0.0
    %963 = vmatpush1.msra.mxu0 0.0
    %964 = vmatprep.subr.mxu0 0.0
    %965 = vmatpush1.msra.mxu0 0.0
    %966 = vmatprep.subr.mxu0 0.0
    %967 = vmatpush1.msra.mxu0 0.0
    %968 = vmatprep.mubr.f32.mxu0 0.0
    %969 = vmatmul.mubr.f32.gmra.mrb[0].mxu0 %v745
    %v970 = vpop.f32.mrb[0].mxu0
    %v971 = vadd.f32 0.0, %v970
    %v972 = vpop.f32.mrb[0].mxu0
    %v973 = vadd.f32 0.0, %v972
    %974 = vmatprep.mubr.f32.mxu0 0.0
    %975 = vmatmul.mubr.f32.gmra.mrb[0].mxu0 %v748
    %v976 = vpop.f32.mrb[0].mxu0
    %v977 = vadd.f32 0.0, %v976
    %v978 = vpop.f32.mrb[0].mxu0
    %v979 = vadd.f32 0.0, %v978
    %980 = vdwg.mxu0
    %981 = vmatprep.subr.mxu0 %v673
    %982 = vmatpush1.msra.mxu0 %v672
    %983 = vmatprep.subr.mxu0 %v682
    %984 = vmatpush1.msra.mxu0 %v681
    %985 = vmatprep.subr.mxu0 %v725
    %986 = vmatpush1.msra.mxu0 %v727
    %987 = vmatprep.subr.mxu0 %v726
    %988 = vmatpush1.msra.mxu0 %v728
    %989 = vmatprep.subr.mxu0 0.0
    %990 = vmatpush1.msra.mxu0 0.0
    %991 = vmatprep.subr.mxu0 0.0
    %992 = vmatpush1.msra.mxu0 0.0
    %993 = vmatprep.subr.mxu0 0.0
    %994 = vmatpush1.msra.mxu0 0.0
    %995 = vmatprep.subr.mxu0 0.0
    %996 = vmatpush1.msra.mxu0 0.0
    %997 = vmatprep.subr.mxu0 0.0
    %998 = vmatpush1.msra.mxu0 0.0
    %999 = vmatprep.subr.mxu0 0.0
    %1000 = vmatpush1.msra.mxu0 0.0
    %1001 = vmatprep.subr.mxu0 0.0
    %1002 = vmatpush1.msra.mxu0 0.0
    %1003 = vmatprep.subr.mxu0 0.0
    %1004 = vmatpush1.msra.mxu0 0.0
    %1005 = vmatprep.subr.mxu0 0.0
    %1006 = vmatpush1.msra.mxu0 0.0
    %1007 = vmatprep.subr.mxu0 0.0
    %1008 = vmatpush1.msra.mxu0 0.0
    %1009 = vmatprep.subr.mxu0 0.0
    %1010 = vmatpush1.msra.mxu0 0.0
    %1011 = vmatprep.subr.mxu0 0.0
    %1012 = vmatpush1.msra.mxu0 0.0
    %1013 = vmatprep.subr.mxu0 0.0
    %1014 = vmatpush1.msra.mxu0 0.0
    %1015 = vmatprep.subr.mxu0 0.0
    %1016 = vmatpush1.msra.mxu0 0.0
    %1017 = vmatprep.subr.mxu0 0.0
    %1018 = vmatpush1.msra.mxu0 0.0
    %1019 = vmatprep.subr.mxu0 0.0
    %1020 = vmatpush1.msra.mxu0 0.0
    %1021 = vmatprep.subr.mxu0 0.0
    %1022 = vmatpush1.msra.mxu0 0.0
    %1023 = vmatprep.subr.mxu0 0.0
    %1024 = vmatpush1.msra.mxu0 0.0
    %1025 = vmatprep.subr.mxu0 0.0
    %1026 = vmatpush1.msra.mxu0 0.0
    %1027 = vmatprep.subr.mxu0 0.0
    %1028 = vmatpush1.msra.mxu0 0.0
    %1029 = vmatprep.subr.mxu0 0.0
    %1030 = vmatpush1.msra.mxu0 0.0
    %1031 = vmatprep.subr.mxu0 0.0
    %1032 = vmatpush1.msra.mxu0 0.0
    %1033 = vmatprep.subr.mxu0 0.0
    %1034 = vmatpush1.msra.mxu0 0.0
    %1035 = vmatprep.subr.mxu0 0.0
    %1036 = vmatpush1.msra.mxu0 0.0
    %1037 = vmatprep.subr.mxu0 0.0
    %1038 = vmatpush1.msra.mxu0 0.0
    %1039 = vmatprep.subr.mxu0 0.0
    %1040 = vmatpush1.msra.mxu0 0.0
    %1041 = vmatprep.subr.mxu0 0.0
    %1042 = vmatpush1.msra.mxu0 0.0
    %1043 = vmatprep.subr.mxu0 0.0
    %1044 = vmatpush1.msra.mxu0 0.0
    %1045 = vmatprep.mubr.f32.mxu0 0.0
    %1046 = vmatmul.mubr.f32.gmra.mrb[0].mxu0 %v745
    %v1047 = vpop.f32.mrb[0].mxu0
    %v1048 = vadd.f32 0.0, %v1047
    %v1049 = vpop.f32.mrb[0].mxu0
    %v1050 = vadd.f32 0.0, %v1049
    %1051 = vmatprep.mubr.f32.mxu0 0.0
    %1052 = vmatmul.mubr.f32.gmra.mrb[0].mxu0 %v748
    %v1053 = vpop.f32.mrb[0].mxu0
    %v1054 = vadd.f32 0.0, %v1053
    %v1055 = vpop.f32.mrb[0].mxu0
    %v1056 = vadd.f32 0.0, %v1055
    %1057 = vdwg.mxu0
    %1058 = vmatprep.subr.mxu0 0.0
    %1059 = vmatpush1.msra.mxu0 %v674
    %1060 = vmatprep.subr.mxu0 0.0
    %1061 = vmatpush1.msra.mxu0 %v683
    %1062 = vmatprep.subr.mxu0 0.0
    %1063 = vmatpush1.msra.mxu0 %v723
    %1064 = vmatprep.subr.mxu0 0.0
    %1065 = vmatpush1.msra.mxu0 %v724
    %1066 = vmatprep.subr.mxu0 0.0
    %1067 = vmatpush1.msra.mxu0 0.0
    %1068 = vmatprep.subr.mxu0 0.0
    %1069 = vmatpush1.msra.mxu0 0.0
    %1070 = vmatprep.subr.mxu0 0.0
    %1071 = vmatpush1.msra.mxu0 0.0
    %1072 = vmatprep.subr.mxu0 0.0
    %1073 = vmatpush1.msra.mxu0 0.0
    %1074 = vmatprep.subr.mxu0 0.0
    %1075 = vmatpush1.msra.mxu0 0.0
    %1076 = vmatprep.subr.mxu0 0.0
    %1077 = vmatpush1.msra.mxu0 0.0
    %1078 = vmatprep.subr.mxu0 0.0
    %1079 = vmatpush1.msra.mxu0 0.0
    %1080 = vmatprep.subr.mxu0 0.0
    %1081 = vmatpush1.msra.mxu0 0.0
    %1082 = vmatprep.subr.mxu0 0.0
    %1083 = vmatpush1.msra.mxu0 0.0
    %1084 = vmatprep.subr.mxu0 0.0
    %1085 = vmatpush1.msra.mxu0 0.0
    %1086 = vmatprep.subr.mxu0 0.0
    %1087 = vmatpush1.msra.mxu0 0.0
    %1088 = vmatprep.subr.mxu0 0.0
    %1089 = vmatpush1.msra.mxu0 0.0
    %1090 = vmatprep.subr.mxu0 0.0
    %1091 = vmatpush1.msra.mxu0 0.0
    %1092 = vmatprep.subr.mxu0 0.0
    %1093 = vmatpush1.msra.mxu0 0.0
    %1094 = vmatprep.subr.mxu0 0.0
    %1095 = vmatpush1.msra.mxu0 0.0
    %1096 = vmatprep.subr.mxu0 0.0
    %1097 = vmatpush1.msra.mxu0 0.0
    %1098 = vmatprep.subr.mxu0 0.0
    %1099 = vmatpush1.msra.mxu0 0.0
    %1100 = vmatprep.subr.mxu0 0.0
    %1101 = vmatpush1.msra.mxu0 0.0
    %1102 = vmatprep.subr.mxu0 0.0
    %1103 = vmatpush1.msra.mxu0 0.0
    %1104 = vmatprep.subr.mxu0 0.0
    %1105 = vmatpush1.msra.mxu0 0.0
    %1106 = vmatprep.subr.mxu0 0.0
    %1107 = vmatpush1.msra.mxu0 0.0
    %1108 = vmatprep.subr.mxu0 0.0
    %1109 = vmatpush1.msra.mxu0 0.0
    %1110 = vmatprep.subr.mxu0 0.0
    %1111 = vmatpush1.msra.mxu0 0.0
    %1112 = vmatprep.subr.mxu0 0.0
    %1113 = vmatpush1.msra.mxu0 0.0
    %1114 = vmatprep.subr.mxu0 0.0
    %1115 = vmatpush1.msra.mxu0 0.0
    %1116 = vmatprep.subr.mxu0 0.0
    %1117 = vmatpush1.msra.mxu0 0.0
    %1118 = vmatprep.subr.mxu0 0.0
    %1119 = vmatpush1.msra.mxu0 0.0
    %1120 = vmatprep.subr.mxu0 0.0
    %1121 = vmatpush1.msra.mxu0 0.0
    %1122 = vmatprep.mubr.f32.mxu0 0.0
    %1123 = vmatmul.mubr.f32.gmra.mrb[0].mxu0 %v745
    %v1124 = vpop.f32.mrb[0].mxu0
    %v1125 = vadd.f32 0.0, %v1124
    %v1126 = vpop.f32.mrb[0].mxu0
    %1127 = vmatprep.mubr.f32.mxu0 0.0
    %1128 = vmatmul.mubr.f32.gmra.mrb[0].mxu0 %v748
    %v1129 = vpop.f32.mrb[0].mxu0
    %v1130 = vadd.f32 0.0, %v1129
    %v1131 = vpop.f32.mrb[0].mxu0
    %1132 = vdwg.mxu0
    %1133 = vrot.lane.b32.xlu0 %v823, 32
    %v1134 = vpop.permute.xlu0 %1133
    %1135 = vrot.lane.b32.xlu0 %v825, 32
    %v1136 = vpop.permute.xlu0 %1135
    %1137 = vrot.lane.b32.xlu0 %v900, 32
    %v1138 = vpop.permute.xlu0 %1137
    %1139 = vrot.lane.b32.xlu0 %v902, 32
    %v1140 = vpop.permute.xlu0 %1139
    %1141 = vrot.lane.b32.xlu0 %v977, 32
    %v1142 = vpop.permute.xlu0 %1141
    %1143 = vrot.lane.b32.xlu0 %v979, 32
    %v1144 = vpop.permute.xlu0 %1143
    %1145 = vrot.lane.b32.xlu0 %v1054, 32
    %v1146 = vpop.permute.xlu0 %1145
    %1147 = vrot.lane.b32.xlu0 %v1056, 32
    %v1148 = vpop.permute.xlu0 %1147
    %1149 = vrot.lane.b32.xlu0 %v1130, 32
    %v1150 = vpop.permute.xlu0 %1149
    %vm1151 = vcmp.lt.s32.totalorder %v721, 32
    %v1152 = vsel %vm1151, %v1148, %v1150
    %v1153 = vsel %vm1151, %v1146, %v1148
    %v1154 = vsel %vm1151, %v1144, %v1146
    %v1155 = vsel %vm1151, %v1142, %v1144
    %v1156 = vsel %vm1151, %v1140, %v1142
    %v1157 = vsel %vm1151, %v1138, %v1140
    %v1158 = vsel %vm1151, %v1136, %v1138
    %v1159 = vsel %vm1151, %v1134, %v1136
    %v1160 = vsel %vm1151, %v1150, %v1134
    %v1161 = vadd.f32 %v817, %v1160
    %v1162 = vadd.f32 %v819, %v1159
    %v1163 = vadd.f32 %v894, %v1158
    %v1164 = vadd.f32 %v896, %v1157
    %v1165 = vadd.f32 %v971, %v1156
    %v1166 = vadd.f32 %v973, %v1155
    %v1167 = vadd.f32 %v1048, %v1154
    %v1168 = vadd.f32 %v1050, %v1153
    %v1169 = vadd.f32 %v1125, %v1152
    %v1170 = vadd.f32 %v1161, %v1162
    %v1171 = vadd.f32 %v1170, %v1163
    %v1172 = vadd.f32 %v1171, %v1164
    %v1173 = vadd.f32 %v1172, %v1165
    %v1174 = vadd.f32 %v1173, %v1166
    %v1175 = vadd.f32 %v1174, %v1167
    %v1176 = vadd.f32 %v1175, %v1168
    %v1177 = vadd.f32 %v1176, %v1169
    %1178 = vadd.xlane.f32.xlu0 %v1177
    %v1179 = vpop.xlane.xlu0 %1178
    %v1180 = vmul.f32 %v1179, 0.0017301039
    %v1181 = vmul.f32 %v1161, %v1161
    %v1182 = vmul.f32 %v1162, %v1162
    %v1183 = vmul.f32 %v1163, %v1163
    %v1184 = vmul.f32 %v1164, %v1164
    %v1185 = vmul.f32 %v1165, %v1165
    %v1186 = vmul.f32 %v1166, %v1166
    %v1187 = vmul.f32 %v1167, %v1167
    %v1188 = vmul.f32 %v1168, %v1168
    %v1189 = vmul.f32 %v1169, %v1169
    %v1190 = vadd.f32 %v1181, %v1182
    %v1191 = vadd.f32 %v1190, %v1183
    %v1192 = vadd.f32 %v1191, %v1184
    %v1193 = vadd.f32 %v1192, %v1185
    %v1194 = vadd.f32 %v1193, %v1186
    %v1195 = vadd.f32 %v1194, %v1187
    %v1196 = vadd.f32 %v1195, %v1188
    %v1197 = vadd.f32 %v1196, %v1189
    %1198 = vadd.xlane.f32.xlu0 %v1197
    %v1199 = vpop.xlane.xlu0 %1198
    %v1200 = vmul.f32 %v1199, 0.0017301039
    %v1201 = vmul.f32 %v1180, %v1180
    %v1202 = vsub.f32 %v1200, %v1201
    %v1203 = vld [vmem:[%s6] sm:$0xff]
    %v1204 = vadd.f32 %v1202, 1e-05
    %v1205 = vrsqrt.pop %v1204
    %v1206 = vmul.f32 %v1203, %v1205
    %1208 = vset.pattern.permute.xlu0 0
    %1209 = vperm.xlu0 %1208, %v1206
    %v1210 = vpop.permute.xlu0 %1209
    %v1212 = vmul.f32 %v1161, %v1210
    %v1213 = vmul.f32 %v1162, %v1210
    %v1214 = vmul.f32 %v1163, %v1210
    %v1215 = vmul.f32 %v1164, %v1210
    %v1216 = vmul.f32 %v1165, %v1210
    %v1217 = vmul.f32 %v1166, %v1210
    %v1218 = vmul.f32 %v1167, %v1210
    %v1219 = vmul.f32 %v1168, %v1210
    %v1220 = vmul.f32 %v1169, %v1210
    %v1221 = vld [vmem:[%s7] sm:$0xff]
    %v1222 = vmul.f32 %v1180, %v1206
    %v1223 = vsub.f32 %v1221, %v1222
    %1225 = vset.pattern.permute.xlu0 0
    %1226 = vperm.xlu0 %1225, %v1223
    %v1227 = vpop.permute.xlu0 %1226
    %v1229 = vadd.f32 %v1212, %v1227
    %v1230 = vadd.f32 %v1213, %v1227
    %v1231 = vadd.f32 %v1214, %v1227
    %v1232 = vadd.f32 %v1215, %v1227
    %v1233 = vadd.f32 %v1216, %v1227
    %v1234 = vadd.f32 %v1217, %v1227
    %v1235 = vadd.f32 %v1218, %v1227
    %v1236 = vadd.f32 %v1219, %v1227
    %v1237 = vadd.f32 %v1220, %v1227
    %v1238 = vmax.f32 %v1229, 0.0
    %v1239 = vmax.f32 %v1230, 0.0
    %v1240 = vmax.f32 %v1231, 0.0
    %v1241 = vmax.f32 %v1232, 0.0
    %v1242 = vmax.f32 %v1233, 0.0
    %v1243 = vmax.f32 %v1234, 0.0
    %v1244 = vmax.f32 %v1235, 0.0
    %v1245 = vmax.f32 %v1236, 0.0
    %v1246 = vmax.f32 %v1237, 0.0
    %1247 = vrot.lane.b32.xlu0 %v1238, 127
    %v1248 = vpop.permute.xlu0 %1247
    %1249 = vrot.lane.b32.xlu0 %v1239, 127
    %v1250 = vpop.permute.xlu0 %1249
    %1251 = vrot.lane.b32.xlu0 %v1240, 127
    %v1252 = vpop.permute.xlu0 %1251
    %1253 = vrot.lane.b32.xlu0 %v1241, 127
    %v1254 = vpop.permute.xlu0 %1253
    %1255 = vrot.lane.b32.xlu0 %v1242, 127
    %v1256 = vpop.permute.xlu0 %1255
    %1257 = vrot.lane.b32.xlu0 %v1243, 127
    %v1258 = vpop.permute.xlu0 %1257
    %1259 = vrot.lane.b32.xlu0 %v1244, 127
    %v1260 = vpop.permute.xlu0 %1259
    %1261 = vrot.lane.b32.xlu0 %v1245, 127
    %v1262 = vpop.permute.xlu0 %1261
    %1263 = vrot.lane.b32.xlu0 %v1246, 127
    %v1264 = vpop.permute.xlu0 %1263
    %vm1265 = vcmp.lt.s32.totalorder %v721, 127
    %v1266 = vsel %vm1265, %v1262, %v1264
    %v1267 = vsel %vm1265, %v1260, %v1262
    %v1268 = vsel %vm1265, %v1258, %v1260
    %v1269 = vsel %vm1265, %v1256, %v1258
    %v1270 = vsel %vm1265, %v1254, %v1256
    %v1271 = vsel %vm1265, %v1252, %v1254
    %v1272 = vsel %vm1265, %v1250, %v1252
    %v1273 = vsel %vm1265, %v1248, %v1250
    %v1274 = vsel %vm1265, %v1264, %v1248
    %1275 = vrot.lane.b32.xlu0 %v1238, 126
    %v1276 = vpop.permute.xlu0 %1275
    %1277 = vrot.lane.b32.xlu0 %v1239, 126
    %v1278 = vpop.permute.xlu0 %1277
    %1279 = vrot.lane.b32.xlu0 %v1240, 126
    %v1280 = vpop.permute.xlu0 %1279
    %1281 = vrot.lane.b32.xlu0 %v1241, 126
    %v1282 = vpop.permute.xlu0 %1281
    %1283 = vrot.lane.b32.xlu0 %v1242, 126
    %v1284 = vpop.permute.xlu0 %1283
    %1285 = vrot.lane.b32.xlu0 %v1243, 126
    %v1286 = vpop.permute.xlu0 %1285
    %1287 = vrot.lane.b32.xlu0 %v1244, 126
    %v1288 = vpop.permute.xlu0 %1287
    %1289 = vrot.lane.b32.xlu0 %v1245, 126
    %v1290 = vpop.permute.xlu0 %1289
    %1291 = vrot.lane.b32.xlu0 %v1246, 126
    %v1292 = vpop.permute.xlu0 %1291
    %vm1293 = vcmp.lt.s32.totalorder %v721, 126
    %v1294 = vsel %vm1293, %v1290, %v1292
    %v1295 = vsel %vm1293, %v1288, %v1290
    %v1296 = vsel %vm1293, %v1286, %v1288
    %v1297 = vsel %vm1293, %v1284, %v1286
    %v1298 = vsel %vm1293, %v1282, %v1284
    %v1299 = vsel %vm1293, %v1280, %v1282
    %v1300 = vsel %vm1293, %v1278, %v1280
    %v1301 = vsel %vm1293, %v1276, %v1278
    %v1302 = vsel %vm1293, %v1292, %v1276
    %1303 = vrot.lane.b32.xlu0 %v1238, 125
    %v1304 = vpop.permute.xlu0 %1303
    %1305 = vrot.lane.b32.xlu0 %v1239, 125
    %v1306 = vpop.permute.xlu0 %1305
    %1307 = vrot.lane.b32.xlu0 %v1240, 125
    %v1308 = vpop.permute.xlu0 %1307
    %1309 = vrot.lane.b32.xlu0 %v1241, 125
    %v1310 = vpop.permute.xlu0 %1309
    %1311 = vrot.lane.b32.xlu0 %v1242, 125
    %v1312 = vpop.permute.xlu0 %1311
    %1313 = vrot.lane.b32.xlu0 %v1243, 125
    %v1314 = vpop.permute.xlu0 %1313
    %1315 = vrot.lane.b32.xlu0 %v1244, 125
    %v1316 = vpop.permute.xlu0 %1315
    %1317 = vrot.lane.b32.xlu0 %v1245, 125
    %v1318 = vpop.permute.xlu0 %1317
    %1319 = vrot.lane.b32.xlu0 %v1246, 125
    %v1320 = vpop.permute.xlu0 %1319
    %vm1321 = vcmp.lt.s32.totalorder %v721, 125
    %v1322 = vsel %vm1321, %v1318, %v1320
    %v1323 = vsel %vm1321, %v1316, %v1318
    %v1324 = vsel %vm1321, %v1314, %v1316
    %v1325 = vsel %vm1321, %v1312, %v1314
    %v1326 = vsel %vm1321, %v1310, %v1312
    %v1327 = vsel %vm1321, %v1308, %v1310
    %v1328 = vsel %vm1321, %v1306, %v1308
    %v1329 = vsel %vm1321, %v1304, %v1306
    %v1330 = vsel %vm1321, %v1320, %v1304
    %v1331 = vld [vmem:[%s8] sm:$0xff]
    %v1332 = vld [vmem:[%s8 + $0x8] sm:$0xff]
    %v1333 = vld [vmem:[%s8 + $0x10] sm:$0xff]
    %v1334 = vld [vmem:[%s8 + $0x18] sm:$0xff]
    %v1336 = vsel %vm743, %v1331, 0
    %v1339 = vsel %vm743, %v1332, 0
    %v1342 = vsel %vm743, %v1333, 0
    %v1345 = vsel %vm743, %v1334, 0
    %1347 = vmatprep.subr.mxu0 %v1239
    %1348 = vmatpush1.msra.mxu0 %v1238
    %1349 = vmatprep.subr.mxu0 %v1272
    %1350 = vmatpush1.msra.mxu0 %v1273
    %1351 = vmatprep.subr.mxu0 %v1300
    %1352 = vmatpush1.msra.mxu0 %v1301
    %1353 = vmatprep.subr.mxu0 %v1328
    %1354 = vmatpush1.msra.mxu0 %v1329
    %1355 = vmatprep.subr.mxu0 0.0
    %1356 = vmatpush1.msra.mxu0 0.0
    %1357 = vmatprep.subr.mxu0 0.0
    %1358 = vmatpush1.msra.mxu0 0.0
    %1359 = vmatprep.subr.mxu0 0.0
    %1360 = vmatpush1.msra.mxu0 0.0
    %1361 = vmatprep.subr.mxu0 0.0
    %1362 = vmatpush1.msra.mxu0 0.0
    %1363 = vmatprep.subr.mxu0 0.0
    %1364 = vmatpush1.msra.mxu0 0.0
    %1365 = vmatprep.subr.mxu0 0.0
    %1366 = vmatpush1.msra.mxu0 0.0
    %1367 = vmatprep.subr.mxu0 0.0
    %1368 = vmatpush1.msra.mxu0 0.0
    %1369 = vmatprep.subr.mxu0 0.0
    %1370 = vmatpush1.msra.mxu0 0.0
    %1371 = vmatprep.subr.mxu0 0.0
    %1372 = vmatpush1.msra.mxu0 0.0
    %1373 = vmatprep.subr.mxu0 0.0
    %1374 = vmatpush1.msra.mxu0 0.0
    %1375 = vmatprep.subr.mxu0 0.0
    %1376 = vmatpush1.msra.mxu0 0.0
    %1377 = vmatprep.subr.mxu0 0.0
    %1378 = vmatpush1.msra.mxu0 0.0
    %1379 = vmatprep.subr.mxu0 0.0
    %1380 = vmatpush1.msra.mxu0 0.0
    %1381 = vmatprep.subr.mxu0 0.0
    %1382 = vmatpush1.msra.mxu0 0.0
    %1383 = vmatprep.subr.mxu0 0.0
    %1384 = vmatpush1.msra.mxu0 0.0
    %1385 = vmatprep.subr.mxu0 0.0
    %1386 = vmatpush1.msra.mxu0 0.0
    %1387 = vmatprep.subr.mxu0 0.0
    %1388 = vmatpush1.msra.mxu0 0.0
    %1389 = vmatprep.subr.mxu0 0.0
    %1390 = vmatpush1.msra.mxu0 0.0
    %1391 = vmatprep.subr.mxu0 0.0
    %1392 = vmatpush1.msra.mxu0 0.0
    %1393 = vmatprep.subr.mxu0 0.0
    %1394 = vmatpush1.msra.mxu0 0.0
    %1395 = vmatprep.subr.mxu0 0.0
    %1396 = vmatpush1.msra.mxu0 0.0
    %1397 = vmatprep.subr.mxu0 0.0
    %1398 = vmatpush1.msra.mxu0 0.0
    %1399 = vmatprep.subr.mxu0 0.0
    %1400 = vmatpush1.msra.mxu0 0.0
    %1401 = vmatprep.subr.mxu0 0.0
    %1402 = vmatpush1.msra.mxu0 0.0
    %1403 = vmatprep.subr.mxu0 0.0
    %1404 = vmatpush1.msra.mxu0 0.0
    %1405 = vmatprep.subr.mxu0 0.0
    %1406 = vmatpush1.msra.mxu0 0.0
    %1407 = vmatprep.subr.mxu0 0.0
    %1408 = vmatpush1.msra.mxu0 0.0
    %1409 = vmatprep.subr.mxu0 0.0
    %1410 = vmatpush1.msra.mxu0 0.0
    %1411 = vmatprep.mubr.f32.mxu0 0.0
    %1412 = vmatmul.mubr.f32.gmra.mrb[0].mxu0 %v1336
    %v1413 = vpop.f32.mrb[0].mxu0
    %v1414 = vadd.f32 0.0, %v1413
    %v1415 = vpop.f32.mrb[0].mxu0
    %v1416 = vadd.f32 0.0, %v1415
    %1417 = vmatprep.mubr.f32.mxu0 0.0
    %1418 = vmatmul.mubr.f32.gmra.mrb[0].mxu0 %v1339
    %v1419 = vpop.f32.mrb[0].mxu0
    %v1420 = vadd.f32 0.0, %v1419
    %v1421 = vpop.f32.mrb[0].mxu0
    %v1422 = vadd.f32 0.0, %v1421
    %1423 = vmatprep.mubr.f32.mxu0 0.0
    %1424 = vmatmul.mubr.f32.gmra.mrb[0].mxu0 %v1342
    %v1425 = vpop.f32.mrb[0].mxu0
    %v1426 = vadd.f32 0.0, %v1425
    %v1427 = vpop.f32.mrb[0].mxu0
    %v1428 = vadd.f32 0.0, %v1427
    %1429 = vmatprep.mubr.f32.mxu0 0.0
    %1430 = vmatmul.mubr.f32.gmra.mrb[0].mxu0 %v1345
    %v1431 = vpop.f32.mrb[0].mxu0
    %v1432 = vadd.f32 0.0, %v1431
    %v1433 = vpop.f32.mrb[0].mxu0
    %v1434 = vadd.f32 0.0, %v1433
    %1435 = vdwg.mxu0
    %1436 = vmatprep.subr.mxu0 %v1241
    %1437 = vmatpush1.msra.mxu0 %v1240
    %1438 = vmatprep.subr.mxu0 %v1270
    %1439 = vmatpush1.msra.mxu0 %v1271
    %1440 = vmatprep.subr.mxu0 %v1298
    %1441 = vmatpush1.msra.mxu0 %v1299
    %1442 = vmatprep.subr.mxu0 %v1326
    %1443 = vmatpush1.msra.mxu0 %v1327
    %1444 = vmatprep.subr.mxu0 0.0
    %1445 = vmatpush1.msra.mxu0 0.0
    %1446 = vmatprep.subr.mxu0 0.0
    %1447 = vmatpush1.msra.mxu0 0.0
    %1448 = vmatprep.subr.mxu0 0.0
    %1449 = vmatpush1.msra.mxu0 0.0
    %1450 = vmatprep.subr.mxu0 0.0
    %1451 = vmatpush1.msra.mxu0 0.0
    %1452 = vmatprep.subr.mxu0 0.0
    %1453 = vmatpush1.msra.mxu0 0.0
    %1454 = vmatprep.subr.mxu0 0.0
    %1455 = vmatpush1.msra.mxu0 0.0
    %1456 = vmatprep.subr.mxu0 0.0
    %1457 = vmatpush1.msra.mxu0 0.0
    %1458 = vmatprep.subr.mxu0 0.0
    %1459 = vmatpush1.msra.mxu0 0.0
    %1460 = vmatprep.subr.mxu0 0.0
    %1461 = vmatpush1.msra.mxu0 0.0
    %1462 = vmatprep.subr.mxu0 0.0
    %1463 = vmatpush1.msra.mxu0 0.0
    %1464 = vmatprep.subr.mxu0 0.0
    %1465 = vmatpush1.msra.mxu0 0.0
    %1466 = vmatprep.subr.mxu0 0.0
    %1467 = vmatpush1.msra.mxu0 0.0
    %1468 = vmatprep.subr.mxu0 0.0
    %1469 = vmatpush1.msra.mxu0 0.0
    %1470 = vmatprep.subr.mxu0 0.0
    %1471 = vmatpush1.msra.mxu0 0.0
    %1472 = vmatprep.subr.mxu0 0.0
    %1473 = vmatpush1.msra.mxu0 0.0
    %1474 = vmatprep.subr.mxu0 0.0
    %1475 = vmatpush1.msra.mxu0 0.0
    %1476 = vmatprep.subr.mxu0 0.0
    %1477 = vmatpush1.msra.mxu0 0.0
    %1478 = vmatprep.subr.mxu0 0.0
    %1479 = vmatpush1.msra.mxu0 0.0
    %1480 = vmatprep.subr.mxu0 0.0
    %1481 = vmatpush1.msra.mxu0 0.0
    %1482 = vmatprep.subr.mxu0 0.0
    %1483 = vmatpush1.msra.mxu0 0.0
    %1484 = vmatprep.subr.mxu0 0.0
    %1485 = vmatpush1.msra.mxu0 0.0
    %1486 = vmatprep.subr.mxu0 0.0
    %1487 = vmatpush1.msra.mxu0 0.0
    %1488 = vmatprep.subr.mxu0 0.0
    %1489 = vmatpush1.msra.mxu0 0.0
    %1490 = vmatprep.subr.mxu0 0.0
    %1491 = vmatpush1.msra.mxu0 0.0
    %1492 = vmatprep.subr.mxu0 0.0
    %1493 = vmatpush1.msra.mxu0 0.0
    %1494 = vmatprep.subr.mxu0 0.0
    %1495 = vmatpush1.msra.mxu0 0.0
    %1496 = vmatprep.subr.mxu0 0.0
    %1497 = vmatpush1.msra.mxu0 0.0
    %1498 = vmatprep.subr.mxu0 0.0
    %1499 = vmatpush1.msra.mxu0 0.0
    %1500 = vmatprep.mubr.f32.mxu0 0.0
    %1501 = vmatmul.mubr.f32.gmra.mrb[0].mxu0 %v1336
    %v1502 = vpop.f32.mrb[0].mxu0
    %v1503 = vadd.f32 0.0, %v1502
    %v1504 = vpop.f32.mrb[0].mxu0
    %v1505 = vadd.f32 0.0, %v1504
    %1506 = vmatprep.mubr.f32.mxu0 0.0
    %1507 = vmatmul.mubr.f32.gmra.mrb[0].mxu0 %v1339
    %v1508 = vpop.f32.mrb[0].mxu0
    %v1509 = vadd.f32 0.0, %v1508
    %v1510 = vpop.f32.mrb[0].mxu0
    %v1511 = vadd.f32 0.0, %v1510
    %1512 = vmatprep.mubr.f32.mxu0 0.0
    %1513 = vmatmul.mubr.f32.gmra.mrb[0].mxu0 %v1342
    %v1514 = vpop.f32.mrb[0].mxu0
    %v1515 = vadd.f32 0.0, %v1514
    %v1516 = vpop.f32.mrb[0].mxu0
    %v1517 = vadd.f32 0.0, %v1516
    %1518 = vmatprep.mubr.f32.mxu0 0.0
    %1519 = vmatmul.mubr.f32.gmra.mrb[0].mxu0 %v1345
    %v1520 = vpop.f32.mrb[0].mxu0
    %v1521 = vadd.f32 0.0, %v1520
    %v1522 = vpop.f32.mrb[0].mxu0
    %v1523 = vadd.f32 0.0, %v1522
    %1524 = vdwg.mxu0
    %1525 = vmatprep.subr.mxu0 %v1243
    %1526 = vmatpush1.msra.mxu0 %v1242
    %1527 = vmatprep.subr.mxu0 %v1268
    %1528 = vmatpush1.msra.mxu0 %v1269
    %1529 = vmatprep.subr.mxu0 %v1296
    %1530 = vmatpush1.msra.mxu0 %v1297
    %1531 = vmatprep.subr.mxu0 %v1324
    %1532 = vmatpush1.msra.mxu0 %v1325
    %1533 = vmatprep.subr.mxu0 0.0
    %1534 = vmatpush1.msra.mxu0 0.0
    %1535 = vmatprep.subr.mxu0 0.0
    %1536 = vmatpush1.msra.mxu0 0.0
    %1537 = vmatprep.subr.mxu0 0.0
    %1538 = vmatpush1.msra.mxu0 0.0
    %1539 = vmatprep.subr.mxu0 0.0
    %1540 = vmatpush1.msra.mxu0 0.0
    %1541 = vmatprep.subr.mxu0 0.0
    %1542 = vmatpush1.msra.mxu0 0.0
    %1543 = vmatprep.subr.mxu0 0.0
    %1544 = vmatpush1.msra.mxu0 0.0
    %1545 = vmatprep.subr.mxu0 0.0
    %1546 = vmatpush1.msra.mxu0 0.0
    %1547 = vmatprep.subr.mxu0 0.0
    %1548 = vmatpush1.msra.mxu0 0.0
    %1549 = vmatprep.subr.mxu0 0.0
    %1550 = vmatpush1.msra.mxu0 0.0
    %1551 = vmatprep.subr.mxu0 0.0
    %1552 = vmatpush1.msra.mxu0 0.0
    %1553 = vmatprep.subr.mxu0 0.0
    %1554 = vmatpush1.msra.mxu0 0.0
    %1555 = vmatprep.subr.mxu0 0.0
    %1556 = vmatpush1.msra.mxu0 0.0
    %1557 = vmatprep.subr.mxu0 0.0
    %1558 = vmatpush1.msra.mxu0 0.0
    %1559 = vmatprep.subr.mxu0 0.0
    %1560 = vmatpush1.msra.mxu0 0.0
    %1561 = vmatprep.subr.mxu0 0.0
    %1562 = vmatpush1.msra.mxu0 0.0
    %1563 = vmatprep.subr.mxu0 0.0
    %1564 = vmatpush1.msra.mxu0 0.0
    %1565 = vmatprep.subr.mxu0 0.0
    %1566 = vmatpush1.msra.mxu0 0.0
    %1567 = vmatprep.subr.mxu0 0.0
    %1568 = vmatpush1.msra.mxu0 0.0
    %1569 = vmatprep.subr.mxu0 0.0
    %1570 = vmatpush1.msra.mxu0 0.0
    %1571 = vmatprep.subr.mxu0 0.0
    %1572 = vmatpush1.msra.mxu0 0.0
    %1573 = vmatprep.subr.mxu0 0.0
    %1574 = vmatpush1.msra.mxu0 0.0
    %1575 = vmatprep.subr.mxu0 0.0
    %1576 = vmatpush1.msra.mxu0 0.0
    %1577 = vmatprep.subr.mxu0 0.0
    %1578 = vmatpush1.msra.mxu0 0.0
    %1579 = vmatprep.subr.mxu0 0.0
    %1580 = vmatpush1.msra.mxu0 0.0
    %1581 = vmatprep.subr.mxu0 0.0
    %1582 = vmatpush1.msra.mxu0 0.0
    %1583 = vmatprep.subr.mxu0 0.0
    %1584 = vmatpush1.msra.mxu0 0.0
    %1585 = vmatprep.subr.mxu0 0.0
    %1586 = vmatpush1.msra.mxu0 0.0
    %1587 = vmatprep.subr.mxu0 0.0
    %1588 = vmatpush1.msra.mxu0 0.0
    %1589 = vmatprep.mubr.f32.mxu0 0.0
    %1590 = vmatmul.mubr.f32.gmra.mrb[0].mxu0 %v1336
    %v1591 = vpop.f32.mrb[0].mxu0
    %v1592 = vadd.f32 0.0, %v1591
    %v1593 = vpop.f32.mrb[0].mxu0
    %v1594 = vadd.f32 0.0, %v1593
    %1595 = vmatprep.mubr.f32.mxu0 0.0
    %1596 = vmatmul.mubr.f32.gmra.mrb[0].mxu0 %v1339
    %v1597 = vpop.f32.mrb[0].mxu0
    %v1598 = vadd.f32 0.0, %v1597
    %v1599 = vpop.f32.mrb[0].mxu0
    %v1600 = vadd.f32 0.0, %v1599
    %1601 = vmatprep.mubr.f32.mxu0 0.0
    %1602 = vmatmul.mubr.f32.gmra.mrb[0].mxu0 %v1342
    %v1603 = vpop.f32.mrb[0].mxu0
    %v1604 = vadd.f32 0.0, %v1603
    %v1605 = vpop.f32.mrb[0].mxu0
    %v1606 = vadd.f32 0.0, %v1605
    %1607 = vmatprep.mubr.f32.mxu0 0.0
    %1608 = vmatmul.mubr.f32.gmra.mrb[0].mxu0 %v1345
    %v1609 = vpop.f32.mrb[0].mxu0
    %v1610 = vadd.f32 0.0, %v1609
    %v1611 = vpop.f32.mrb[0].mxu0
    %v1612 = vadd.f32 0.0, %v1611
    %1613 = vdwg.mxu0
    %1614 = vmatprep.subr.mxu0 %v1245
    %1615 = vmatpush1.msra.mxu0 %v1244
    %1616 = vmatprep.subr.mxu0 %v1266
    %1617 = vmatpush1.msra.mxu0 %v1267
    %1618 = vmatprep.subr.mxu0 %v1294
    %1619 = vmatpush1.msra.mxu0 %v1295
    %1620 = vmatprep.subr.mxu0 %v1322
    %1621 = vmatpush1.msra.mxu0 %v1323
    %1622 = vmatprep.subr.mxu0 0.0
    %1623 = vmatpush1.msra.mxu0 0.0
    %1624 = vmatprep.subr.mxu0 0.0
    %1625 = vmatpush1.msra.mxu0 0.0
    %1626 = vmatprep.subr.mxu0 0.0
    %1627 = vmatpush1.msra.mxu0 0.0
    %1628 = vmatprep.subr.mxu0 0.0
    %1629 = vmatpush1.msra.mxu0 0.0
    %1630 = vmatprep.subr.mxu0 0.0
    %1631 = vmatpush1.msra.mxu0 0.0
    %1632 = vmatprep.subr.mxu0 0.0
    %1633 = vmatpush1.msra.mxu0 0.0
    %1634 = vmatprep.subr.mxu0 0.0
    %1635 = vmatpush1.msra.mxu0 0.0
    %1636 = vmatprep.subr.mxu0 0.0
    %1637 = vmatpush1.msra.mxu0 0.0
    %1638 = vmatprep.subr.mxu0 0.0
    %1639 = vmatpush1.msra.mxu0 0.0
    %1640 = vmatprep.subr.mxu0 0.0
    %1641 = vmatpush1.msra.mxu0 0.0
    %1642 = vmatprep.subr.mxu0 0.0
    %1643 = vmatpush1.msra.mxu0 0.0
    %1644 = vmatprep.subr.mxu0 0.0
    %1645 = vmatpush1.msra.mxu0 0.0
    %1646 = vmatprep.subr.mxu0 0.0
    %1647 = vmatpush1.msra.mxu0 0.0
    %1648 = vmatprep.subr.mxu0 0.0
    %1649 = vmatpush1.msra.mxu0 0.0
    %1650 = vmatprep.subr.mxu0 0.0
    %1651 = vmatpush1.msra.mxu0 0.0
    %1652 = vmatprep.subr.mxu0 0.0
    %1653 = vmatpush1.msra.mxu0 0.0
    %1654 = vmatprep.subr.mxu0 0.0
    %1655 = vmatpush1.msra.mxu0 0.0
    %1656 = vmatprep.subr.mxu0 0.0
    %1657 = vmatpush1.msra.mxu0 0.0
    %1658 = vmatprep.subr.mxu0 0.0
    %1659 = vmatpush1.msra.mxu0 0.0
    %1660 = vmatprep.subr.mxu0 0.0
    %1661 = vmatpush1.msra.mxu0 0.0
    %1662 = vmatprep.subr.mxu0 0.0
    %1663 = vmatpush1.msra.mxu0 0.0
    %1664 = vmatprep.subr.mxu0 0.0
    %1665 = vmatpush1.msra.mxu0 0.0
    %1666 = vmatprep.subr.mxu0 0.0
    %1667 = vmatpush1.msra.mxu0 0.0
    %1668 = vmatprep.subr.mxu0 0.0
    %1669 = vmatpush1.msra.mxu0 0.0
    %1670 = vmatprep.subr.mxu0 0.0
    %1671 = vmatpush1.msra.mxu0 0.0
    %1672 = vmatprep.subr.mxu0 0.0
    %1673 = vmatpush1.msra.mxu0 0.0
    %1674 = vmatprep.subr.mxu0 0.0
    %1675 = vmatpush1.msra.mxu0 0.0
    %1676 = vmatprep.subr.mxu0 0.0
    %1677 = vmatpush1.msra.mxu0 0.0
    %1678 = vmatprep.mubr.f32.mxu0 0.0
    %1679 = vmatmul.mubr.f32.gmra.mrb[0].mxu0 %v1336
    %v1680 = vpop.f32.mrb[0].mxu0
    %v1681 = vadd.f32 0.0, %v1680
    %v1682 = vpop.f32.mrb[0].mxu0
    %v1683 = vadd.f32 0.0, %v1682
    %1684 = vmatprep.mubr.f32.mxu0 0.0
    %1685 = vmatmul.mubr.f32.gmra.mrb[0].mxu0 %v1339
    %v1686 = vpop.f32.mrb[0].mxu0
    %v1687 = vadd.f32 0.0, %v1686
    %v1688 = vpop.f32.mrb[0].mxu0
    %v1689 = vadd.f32 0.0, %v1688
    %1690 = vmatprep.mubr.f32.mxu0 0.0
    %1691 = vmatmul.mubr.f32.gmra.mrb[0].mxu0 %v1342
    %v1692 = vpop.f32.mrb[0].mxu0
    %v1693 = vadd.f32 0.0, %v1692
    %v1694 = vpop.f32.mrb[0].mxu0
    %v1695 = vadd.f32 0.0, %v1694
    %1696 = vmatprep.mubr.f32.mxu0 0.0
    %1697 = vmatmul.mubr.f32.gmra.mrb[0].mxu0 %v1345
    %v1698 = vpop.f32.mrb[0].mxu0
    %v1699 = vadd.f32 0.0, %v1698
    %v1700 = vpop.f32.mrb[0].mxu0
    %v1701 = vadd.f32 0.0, %v1700
    %1702 = vdwg.mxu0
    %1703 = vmatprep.subr.mxu0 0.0
    %1704 = vmatpush1.msra.mxu0 %v1246
    %1705 = vmatprep.subr.mxu0 0.0
    %1706 = vmatpush1.msra.mxu0 %v1274
    %1707 = vmatprep.subr.mxu0 0.0
    %1708 = vmatpush1.msra.mxu0 %v1302
    %1709 = vmatprep.subr.mxu0 0.0
    %1710 = vmatpush1.msra.mxu0 %v1330
    %1711 = vmatprep.subr.mxu0 0.0
    %1712 = vmatpush1.msra.mxu0 0.0
    %1713 = vmatprep.subr.mxu0 0.0
    %1714 = vmatpush1.msra.mxu0 0.0
    %1715 = vmatprep.subr.mxu0 0.0
    %1716 = vmatpush1.msra.mxu0 0.0
    %1717 = vmatprep.subr.mxu0 0.0
    %1718 = vmatpush1.msra.mxu0 0.0
    %1719 = vmatprep.subr.mxu0 0.0
    %1720 = vmatpush1.msra.mxu0 0.0
    %1721 = vmatprep.subr.mxu0 0.0
    %1722 = vmatpush1.msra.mxu0 0.0
    %1723 = vmatprep.subr.mxu0 0.0
    %1724 = vmatpush1.msra.mxu0 0.0
    %1725 = vmatprep.subr.mxu0 0.0
    %1726 = vmatpush1.msra.mxu0 0.0
    %1727 = vmatprep.subr.mxu0 0.0
    %1728 = vmatpush1.msra.mxu0 0.0
    %1729 = vmatprep.subr.mxu0 0.0
    %1730 = vmatpush1.msra.mxu0 0.0
    %1731 = vmatprep.subr.mxu0 0.0
    %1732 = vmatpush1.msra.mxu0 0.0
    %1733 = vmatprep.subr.mxu0 0.0
    %1734 = vmatpush1.msra.mxu0 0.0
    %1735 = vmatprep.subr.mxu0 0.0
    %1736 = vmatpush1.msra.mxu0 0.0
    %1737 = vmatprep.subr.mxu0 0.0
    %1738 = vmatpush1.msra.mxu0 0.0
    %1739 = vmatprep.subr.mxu0 0.0
    %1740 = vmatpush1.msra.mxu0 0.0
    %1741 = vmatprep.subr.mxu0 0.0
    %1742 = vmatpush1.msra.mxu0 0.0
    %1743 = vmatprep.subr.mxu0 0.0
    %1744 = vmatpush1.msra.mxu0 0.0
    %1745 = vmatprep.subr.mxu0 0.0
    %1746 = vmatpush1.msra.mxu0 0.0
    %1747 = vmatprep.subr.mxu0 0.0
    %1748 = vmatpush1.msra.mxu0 0.0
    %1749 = vmatprep.subr.mxu0 0.0
    %1750 = vmatpush1.msra.mxu0 0.0
    %1751 = vmatprep.subr.mxu0 0.0
    %1752 = vmatpush1.msra.mxu0 0.0
    %1753 = vmatprep.subr.mxu0 0.0
    %1754 = vmatpush1.msra.mxu0 0.0
    %1755 = vmatprep.subr.mxu0 0.0
    %1756 = vmatpush1.msra.mxu0 0.0
    %1757 = vmatprep.subr.mxu0 0.0
    %1758 = vmatpush1.msra.mxu0 0.0
    %1759 = vmatprep.subr.mxu0 0.0
    %1760 = vmatpush1.msra.mxu0 0.0
    %1761 = vmatprep.subr.mxu0 0.0
    %1762 = vmatpush1.msra.mxu0 0.0
    %1763 = vmatprep.subr.mxu0 0.0
    %1764 = vmatpush1.msra.mxu0 0.0
    %1765 = vmatprep.subr.mxu0 0.0
    %1766 = vmatpush1.msra.mxu0 0.0
    %1767 = vmatprep.mubr.f32.mxu0 0.0
    %1768 = vmatmul.mubr.f32.gmra.mrb[0].mxu0 %v1336
    %v1769 = vpop.f32.mrb[0].mxu0
    %v1770 = vadd.f32 0.0, %v1769
    %v1771 = vpop.f32.mrb[0].mxu0
    %1772 = vmatprep.mubr.f32.mxu0 0.0
    %1773 = vmatmul.mubr.f32.gmra.mrb[0].mxu0 %v1339
    %v1774 = vpop.f32.mrb[0].mxu0
    %v1775 = vadd.f32 0.0, %v1774
    %v1776 = vpop.f32.mrb[0].mxu0
    %1777 = vmatprep.mubr.f32.mxu0 0.0
    %1778 = vmatmul.mubr.f32.gmra.mrb[0].mxu0 %v1342
    %v1779 = vpop.f32.mrb[0].mxu0
    %v1780 = vadd.f32 0.0, %v1779
    %v1781 = vpop.f32.mrb[0].mxu0
    %1782 = vmatprep.mubr.f32.mxu0 0.0
    %1783 = vmatmul.mubr.f32.gmra.mrb[0].mxu0 %v1345
    %v1784 = vpop.f32.mrb[0].mxu0
    %v1785 = vadd.f32 0.0, %v1784
    %v1786 = vpop.f32.mrb[0].mxu0
    %1787 = vdwg.mxu0
    %1788 = vrot.lane.b32.xlu0 %v1420, 96
    %v1789 = vpop.permute.xlu0 %1788
    %1790 = vrot.lane.b32.xlu0 %v1422, 96
    %v1791 = vpop.permute.xlu0 %1790
    %1792 = vrot.lane.b32.xlu0 %v1509, 96
    %v1793 = vpop.permute.xlu0 %1792
    %1794 = vrot.lane.b32.xlu0 %v1511, 96
    %v1795 = vpop.permute.xlu0 %1794
    %1796 = vrot.lane.b32.xlu0 %v1598, 96
    %v1797 = vpop.permute.xlu0 %1796
    %1798 = vrot.lane.b32.xlu0 %v1600, 96
    %v1799 = vpop.permute.xlu0 %1798
    %1800 = vrot.lane.b32.xlu0 %v1687, 96
    %v1801 = vpop.permute.xlu0 %1800
    %1802 = vrot.lane.b32.xlu0 %v1689, 96
    %v1803 = vpop.permute.xlu0 %1802
    %1804 = vrot.lane.b32.xlu0 %v1775, 96
    %v1805 = vpop.permute.xlu0 %1804
    %vm1806 = vcmp.lt.s32.totalorder %v721, 96
    %v1807 = vsel %vm1806, %v1803, %v1805
    %v1808 = vsel %vm1806, %v1801, %v1803
    %v1809 = vsel %vm1806, %v1799, %v1801
    %v1810 = vsel %vm1806, %v1797, %v1799
    %v1811 = vsel %vm1806, %v1795, %v1797
    %v1812 = vsel %vm1806, %v1793, %v1795
    %v1813 = vsel %vm1806, %v1791, %v1793
    %v1814 = vsel %vm1806, %v1789, %v1791
    %v1815 = vsel %vm1806, %v1805, %v1789
    %v1816 = vadd.f32 %v1414, %v1814
    %v1817 = vadd.f32 %v1416, %v1813
    %v1818 = vadd.f32 %v1503, %v1812
    %v1819 = vadd.f32 %v1505, %v1811
    %v1820 = vadd.f32 %v1592, %v1810
    %v1821 = vadd.f32 %v1594, %v1809
    %v1822 = vadd.f32 %v1681, %v1808
    %v1823 = vadd.f32 %v1683, %v1807
    %v1824 = vadd.f32 %v1770, %v1815
    %1825 = vrot.lane.b32.xlu0 %v1426, 64
    %v1826 = vpop.permute.xlu0 %1825
    %1827 = vrot.lane.b32.xlu0 %v1428, 64
    %v1828 = vpop.permute.xlu0 %1827
    %1829 = vrot.lane.b32.xlu0 %v1515, 64
    %v1830 = vpop.permute.xlu0 %1829
    %1831 = vrot.lane.b32.xlu0 %v1517, 64
    %v1832 = vpop.permute.xlu0 %1831
    %1833 = vrot.lane.b32.xlu0 %v1604, 64
    %v1834 = vpop.permute.xlu0 %1833
    %1835 = vrot.lane.b32.xlu0 %v1606, 64
    %v1836 = vpop.permute.xlu0 %1835
    %1837 = vrot.lane.b32.xlu0 %v1693, 64
    %v1838 = vpop.permute.xlu0 %1837
    %1839 = vrot.lane.b32.xlu0 %v1695, 64
    %v1840 = vpop.permute.xlu0 %1839
    %1841 = vrot.lane.b32.xlu0 %v1780, 64
    %v1842 = vpop.permute.xlu0 %1841
    %vm1843 = vcmp.lt.s32.totalorder %v721, 64
    %v1844 = vsel %vm1843, %v1840, %v1842
    %v1845 = vsel %vm1843, %v1838, %v1840
    %v1846 = vsel %vm1843, %v1836, %v1838
    %v1847 = vsel %vm1843, %v1834, %v1836
    %v1848 = vsel %vm1843, %v1832, %v1834
    %v1849 = vsel %vm1843, %v1830, %v1832
    %v1850 = vsel %vm1843, %v1828, %v1830
    %v1851 = vsel %vm1843, %v1826, %v1828
    %v1852 = vsel %vm1843, %v1842, %v1826
    %v1853 = vadd.f32 %v1816, %v1851
    %v1854 = vadd.f32 %v1817, %v1850
    %v1855 = vadd.f32 %v1818, %v1849
    %v1856 = vadd.f32 %v1819, %v1848
    %v1857 = vadd.f32 %v1820, %v1847
    %v1858 = vadd.f32 %v1821, %v1846
    %v1859 = vadd.f32 %v1822, %v1845
    %v1860 = vadd.f32 %v1823, %v1844
    %v1861 = vadd.f32 %v1824, %v1852
    %1862 = vrot.lane.b32.xlu0 %v1432, 32
    %v1863 = vpop.permute.xlu0 %1862
    %1864 = vrot.lane.b32.xlu0 %v1434, 32
    %v1865 = vpop.permute.xlu0 %1864
    %1866 = vrot.lane.b32.xlu0 %v1521, 32
    %v1867 = vpop.permute.xlu0 %1866
    %1868 = vrot.lane.b32.xlu0 %v1523, 32
    %v1869 = vpop.permute.xlu0 %1868
    %1870 = vrot.lane.b32.xlu0 %v1610, 32
    %v1871 = vpop.permute.xlu0 %1870
    %1872 = vrot.lane.b32.xlu0 %v1612, 32
    %v1873 = vpop.permute.xlu0 %1872
    %1874 = vrot.lane.b32.xlu0 %v1699, 32
    %v1875 = vpop.permute.xlu0 %1874
    %1876 = vrot.lane.b32.xlu0 %v1701, 32
    %v1877 = vpop.permute.xlu0 %1876
    %1878 = vrot.lane.b32.xlu0 %v1785, 32
    %v1879 = vpop.permute.xlu0 %1878
    %v1880 = vsel %vm1151, %v1877, %v1879
    %v1881 = vsel %vm1151, %v1875, %v1877
    %v1882 = vsel %vm1151, %v1873, %v1875
    %v1883 = vsel %vm1151, %v1871, %v1873
    %v1884 = vsel %vm1151, %v1869, %v1871
    %v1885 = vsel %vm1151, %v1867, %v1869
    %v1886 = vsel %vm1151, %v1865, %v1867
    %v1887 = vsel %vm1151, %v1863, %v1865
    %v1888 = vsel %vm1151, %v1879, %v1863
    %v1889 = vadd.f32 %v1853, %v1887
    %v1890 = vadd.f32 %v1854, %v1886
    %v1891 = vadd.f32 %v1855, %v1885
    %v1892 = vadd.f32 %v1856, %v1884
    %v1893 = vadd.f32 %v1857, %v1883
    %v1894 = vadd.f32 %v1858, %v1882
    %v1895 = vadd.f32 %v1859, %v1881
    %v1896 = vadd.f32 %v1860, %v1880
    %v1897 = vadd.f32 %v1861, %v1888
    %v1898 = vld [vmem:[%s9] sm:$0xff]
    %1900 = vset.pattern.permute.xlu0 0
    %1901 = vperm.xlu0 %1900, %v1898
    %v1902 = vpop.permute.xlu0 %1901
    %v1904 = vadd.f32 %v1889, %v1902
    %v1905 = vadd.f32 %v1890, %v1902
    %v1906 = vadd.f32 %v1891, %v1902
    %v1907 = vadd.f32 %v1892, %v1902
    %v1908 = vadd.f32 %v1893, %v1902
    %v1909 = vadd.f32 %v1894, %v1902
    %v1910 = vadd.f32 %v1895, %v1902
    %v1911 = vadd.f32 %v1896, %v1902
    %v1912 = vadd.f32 %v1897, %v1902
    %v1913 = vmin.f32 %v1904, 0.0
    %v1914 = vmin.f32 %v1905, 0.0
    %v1915 = vmin.f32 %v1906, 0.0
    %v1916 = vmin.f32 %v1907, 0.0
    %v1917 = vmin.f32 %v1908, 0.0
    %v1918 = vmin.f32 %v1909, 0.0
    %v1919 = vmin.f32 %v1910, 0.0
    %v1920 = vmin.f32 %v1911, 0.0
    %v1921 = vmin.f32 %v1912, 0.0
    %v1922 = vand.u32 2147483647, %v1904
    %v1923 = vand.u32 2147483647, %v1905
    %v1924 = vand.u32 2147483647, %v1906
    %v1925 = vand.u32 2147483647, %v1907
    %v1926 = vand.u32 2147483647, %v1908
    %v1927 = vand.u32 2147483647, %v1909
    %v1928 = vand.u32 2147483647, %v1910
    %v1929 = vand.u32 2147483647, %v1911
    %v1930 = vand.u32 2147483647, %v1912
    %v1931 = vsub.f32 0.0, %v1922
    %v1932 = vsub.f32 0.0, %v1923
    %v1933 = vsub.f32 0.0, %v1924
    %v1934 = vsub.f32 0.0, %v1925
    %v1935 = vsub.f32 0.0, %v1926
    %v1936 = vsub.f32 0.0, %v1927
    %v1937 = vsub.f32 0.0, %v1928
    %v1938 = vsub.f32 0.0, %v1929
    %v1939 = vsub.f32 0.0, %v1930
    %v1940 = vmul.f32 %v1931, 1.442695
    %v1941 = vpow.pop %v1940
    %v1942 = vmul.f32 %v1932, 1.442695
    %v1943 = vpow.pop %v1942
    %v1944 = vmul.f32 %v1933, 1.442695
    %v1945 = vpow.pop %v1944
    %v1946 = vmul.f32 %v1934, 1.442695
    %v1947 = vpow.pop %v1946
    %v1948 = vmul.f32 %v1935, 1.442695
    %v1949 = vpow.pop %v1948
    %v1950 = vmul.f32 %v1936, 1.442695
    %v1951 = vpow.pop %v1950
    %v1952 = vmul.f32 %v1937, 1.442695
    %v1953 = vpow.pop %v1952
    %v1954 = vmul.f32 %v1938, 1.442695
    %v1955 = vpow.pop %v1954
    %v1956 = vmul.f32 %v1939, 1.442695
    %v1957 = vpow.pop %v1956
    %v1958 = vadd.f32 %v1941, 1.0
    %v1959 = vadd.f32 %v1943, 1.0
    %v1960 = vadd.f32 %v1945, 1.0
    %v1961 = vadd.f32 %v1947, 1.0
    %v1962 = vadd.f32 %v1949, 1.0
    %v1963 = vadd.f32 %v1951, 1.0
    %v1964 = vadd.f32 %v1953, 1.0
    %v1965 = vadd.f32 %v1955, 1.0
    %v1966 = vadd.f32 %v1957, 1.0
    %v1967 = vlog2.pop %v1958
    %v1968 = vmul.f32 %v1967, 0.6931472
    %v1969 = vlog2.pop %v1959
    %v1970 = vmul.f32 %v1969, 0.6931472
    %v1971 = vlog2.pop %v1960
    %v1972 = vmul.f32 %v1971, 0.6931472
    %v1973 = vlog2.pop %v1961
    %v1974 = vmul.f32 %v1973, 0.6931472
    %v1975 = vlog2.pop %v1962
    %v1976 = vmul.f32 %v1975, 0.6931472
    %v1977 = vlog2.pop %v1963
    %v1978 = vmul.f32 %v1977, 0.6931472
    %v1979 = vlog2.pop %v1964
    %v1980 = vmul.f32 %v1979, 0.6931472
    %v1981 = vlog2.pop %v1965
    %v1982 = vmul.f32 %v1981, 0.6931472
    %v1983 = vlog2.pop %v1966
    %v1984 = vmul.f32 %v1983, 0.6931472
    %v1985 = vsub.f32 %v1913, %v1968
    %v1986 = vsub.f32 %v1914, %v1970
    %v1987 = vsub.f32 %v1915, %v1972
    %v1988 = vsub.f32 %v1916, %v1974
    %v1989 = vsub.f32 %v1917, %v1976
    %v1990 = vsub.f32 %v1918, %v1978
    %v1991 = vsub.f32 %v1919, %v1980
    %v1992 = vsub.f32 %v1920, %v1982
    %v1993 = vsub.f32 %v1921, %v1984
    %1994 = vst [vmem:[#allocation7] sm:$0xff] %v1985
    %1995 = vst [vmem:[#allocation7 + $0x8] sm:$0xff] %v1986
    %1996 = vst [vmem:[#allocation7 + $0x10] sm:$0xff] %v1987
    %1997 = vst [vmem:[#allocation7 + $0x18] sm:$0xff] %v1988
    %1998 = vst [vmem:[#allocation7 + $0x20] sm:$0xff] %v1989
    %1999 = vst [vmem:[#allocation7 + $0x28] sm:$0xff] %v1990
    %2000 = vst [vmem:[#allocation7 + $0x30] sm:$0xff] %v1991
    %2001 = vst [vmem:[#allocation7 + $0x38] sm:$0xff] %v1992
    %2002 = vst [vmem:[#allocation7 + $0x40] sm:$0xff] %v1993
    // Predicated region
    $region50: #{tpu_custom_call.1} parent=1 // pred_check
      _
    $region51: #{tpu_custom_call.1} parent=1 // pred_check_branch
      %2004 = sbr.rel (0) target = $region53
    $region52: #{tpu_custom_call.1} parent=1 // pred_region
      %s2006 = ssub.s32 1152, 1152
      %2007 = vsyncadd [#allocation4], %s2006
      %s2009 = sshll.u32 [#allocation7], 4
      %s2010 = int_to_ptr.vmem [resolvable:$true] %s2009
      %2012 = dma.vmem_to_hbm [thread:$0]  %s2010, 1152, %s10, [#allocation4]
    $region53: #{tpu_custom_call.1} parent=1 // pred_fallthru
      _
    // Predicated region
    $region54: #{tpu_custom_call.1} parent=1 // pred_check
      _
    $region55: #{tpu_custom_call.1} parent=1 // pred_check_branch
      %2014 = sbr.rel (0) target = $region57
    $region56: #{tpu_custom_call.1} parent=1 // pred_region
      %2015 = dma.done [#allocation4], 1152
    $region57: #{tpu_custom_call.1} parent=1 // pred_fallthru
      _
    %2016 = vsyncpa [#allocation3], 1
    %2017 = vsyncpa [#allocation6], 1
    %2018 = vsyncpa [#allocation4], 1

</llo_original>
